<compile_context>
chip_gen: v7x
topology: tpu7x:2x2x1
jax: 0.10.0
libtpu: 0.0.40
codegen_flags: <defaults>
</compile_context>

<pallas_src>
import functools
import math

import jax
import jax.numpy as jnp
from jax.experimental import pallas as pl
from jax.experimental.pallas import tpu as pltpu


def _sa_layer_kernel(xq_ref, xkv_ref, wqk_ref, wv_ref, bv_ref, o_ref,
                     q_scr, m_scr, l_scr, acc_scr, *, tk, sqrt_scale):
    """Fused q/v projection + online-softmax attention for one (batch, kv-tile)."""
    ki = pl.program_id(1)
    nk = pl.num_programs(1)

    @pl.when(ki == 0)
    def _init():
        # Shared q/k projection, computed ONCE per batch element (q == k).
        # sqrt(scale) is folded in so q . k^T later carries the full 1/sqrt(C).
        q = jnp.dot(xq_ref[0], wqk_ref[...],
                    preferred_element_type=jnp.float32)            # (N, C) f32
        q_scr[...] = (q * sqrt_scale).astype(jnp.bfloat16)
        m_scr[...] = jnp.full_like(m_scr, -jnp.inf)
        l_scr[...] = jnp.zeros_like(l_scr)
        acc_scr[...] = jnp.zeros_like(acc_scr)

    # v projection for this KV tile (1x1 conv with bias); bias added in f32.
    v = jnp.dot(xkv_ref[0], wv_ref[...], preferred_element_type=jnp.float32)
    v = (v + bv_ref[...]).astype(jnp.bfloat16)                     # (tk, C)

    # K tile is just a slice of the shared projection (q == k): no re-projection.
    start = pl.multiple_of(ki * tk, tk)
    k = q_scr[pl.ds(start, tk), :]                                 # (tk, C) bf16

    # Scores (N, tk); 1/sqrt(C) already carried by both operands.
    s = jax.lax.dot_general(
        q_scr[...], k,
        dimension_numbers=(((1,), (1,)), ((), ())),
        preferred_element_type=jnp.float32)

    # Online softmax update (all statistics in f32).
    m_new = jnp.maximum(m_scr[...], jnp.max(s, axis=-1, keepdims=True))
    alpha = jnp.exp(m_scr[...] - m_new)
    p = jnp.exp(s - m_new)
    l_scr[...] = alpha * l_scr[...] + jnp.sum(p, axis=-1, keepdims=True)
    acc_scr[...] = alpha * acc_scr[...] + jnp.dot(
        p.astype(jnp.bfloat16), v, preferred_element_type=jnp.float32)
    m_scr[...] = m_new

    @pl.when(ki == nk - 1)
    def _finalize():
        inv_l = pl.reciprocal(l_scr[...], approx=True)
        o_ref[0] = (acc_scr[...] * inv_l).astype(o_ref.dtype)


def _build_sa_call(B, N, C, tk):
    kernel = functools.partial(_sa_layer_kernel, tk=tk, sqrt_scale=C ** -0.25)
    return pl.pallas_call(
        kernel,
        out_shape=jax.ShapeDtypeStruct((B, N, C), jnp.float32),
        grid_spec=pltpu.PrefetchScalarGridSpec(
            num_scalar_prefetch=0,
            grid=(B, N // tk),
            in_specs=[
                pl.BlockSpec((1, N, C), lambda b, k: (b, 0, 0)),   # full x (q side)
                pl.BlockSpec((1, tk, C), lambda b, k: (b, k, 0)),  # kv tile of x
                pl.BlockSpec((C, C), lambda b, k: (0, 0)),         # Wqk^T (bf16)
                pl.BlockSpec((C, C), lambda b, k: (0, 0)),         # Wv^T  (bf16)
                pl.BlockSpec((1, C), lambda b, k: (0, 0)),         # v bias (f32)
            ],
            out_specs=pl.BlockSpec((1, N, C), lambda b, k: (b, 0, 0)),
            scratch_shapes=[
                pltpu.VMEM((N, C), jnp.bfloat16),   # shared q (== k) projection
                pltpu.VMEM((N, 1), jnp.float32),    # running max
                pltpu.VMEM((N, 1), jnp.float32),    # running denom
                pltpu.VMEM((N, C), jnp.float32),    # running output accumulator
            ],
        ),
        compiler_params=pltpu.CompilerParams(
            dimension_semantics=("parallel", "arbitrary")),
    )


@functools.partial(jax.jit, static_argnames=("tk",))
def sa_layer_forward(x_ncl, w_qk, w_v, b_v, *, tk=128):
    """SA_Layer.forward.  x_ncl: (B, C, N) f32 -> (B, N, 1, C) f32."""
    B, C, N = x_ncl.shape
    tk = min(tk, N)
    # TODO(synk): add padding/masking for N not a multiple of 8/tk and C not a
    # multiple of 128; only the TPU-tile-aligned path is implemented here.
    assert N % tk == 0 and tk % 8 == 0, "N must be a multiple of tk (and tk of 8)"
    assert C % 128 == 0, "channels must be a multiple of 128 (lane width)"

    x_nlc = jnp.transpose(x_ncl, (0, 2, 1)).astype(jnp.bfloat16)  # (B, N, C)
    wqk_t = w_qk.T.astype(jnp.bfloat16)                           # (C_in, C_out)
    wv_t = w_v.T.astype(jnp.bfloat16)
    bv = b_v.reshape(1, C).astype(jnp.float32)

    out = _build_sa_call(B, N, C, tk)(x_nlc, x_nlc, wqk_t, wv_t, bv)
    return out.reshape(B, N, 1, C)                 # matches .unsqueeze(2) head axis


def sa_layer_reference(x_ncl, w_qk, w_v, b_v):
    """Pure-JAX f32 reference of SA_Layer.forward (flash_attn -> exact softmax)."""
    C = x_ncl.shape[1]
    q = jnp.einsum('oc,bcn->bno', w_qk, x_ncl)
    v = jnp.einsum('oc,bcn->bno', w_v, x_ncl) + b_v
    s = jnp.einsum('bic,bjc->bij', q, q) / math.sqrt(C)
    p = jax.nn.softmax(s, axis=-1)
    o = jnp.einsum('bij,bjc->bic', p, v)
    return o[:, :, None, :]


if __name__ == "__main__":
    key = jax.random.PRNGKey(0)
    kx, kq, kv, kb = jax.random.split(key, 4)

    B, C, N = 2, 128, 256                       # small, TPU-tile-aligned shapes
    x = jax.random.normal(kx, (B, C, N), dtype=jnp.float32)
    w_qk = 0.05 * jax.random.normal(kq, (C, C), dtype=jnp.float32)  # shared q/k weight
    w_v = 0.05 * jax.random.normal(kv, (C, C), dtype=jnp.float32)
    b_v = 0.05 * jax.random.normal(kb, (C,), dtype=jnp.float32)

    out = sa_layer_forward(x, w_qk, w_v, b_v)
    out = jax.block_until_ready(out)
    assert out.shape == (B, N, 1, C) and out.dtype == jnp.float32

    ref = sa_layer_reference(x, w_qk, w_v, b_v)
    max_err = float(jnp.max(jnp.abs(out - ref)))
    assert max_err < 5e-2, f"max abs error {max_err} too large vs f32 reference"

    print("KERNEL_OK")
</pallas_src>

<mosaic_0001>
module attributes {stable_mosaic.version = 11 : i64} {
  func.func @_sa_layer_kernel(%arg0: i32, %arg1: i32, %arg2: memref<1x256x128xbf16, #tpu.memory_space<vmem>>, %arg3: memref<1x128x128xbf16, #tpu.memory_space<vmem>>, %arg4: memref<128x128xbf16, #tpu.memory_space<vmem>>, %arg5: memref<128x128xbf16, #tpu.memory_space<vmem>>, %arg6: memref<1x128xf32, #tpu.memory_space<vmem>>, %arg7: memref<1x256x128xf32, #tpu.memory_space<vmem>>, %arg8: memref<256x128xbf16, #tpu.memory_space<vmem>>, %arg9: memref<256x1xf32, #tpu.memory_space<vmem>>, %arg10: memref<256x1xf32, #tpu.memory_space<vmem>>, %arg11: memref<256x128xf32, #tpu.memory_space<vmem>>) attributes {dimension_semantics = [#tpu.dimension_semantics<parallel>, #tpu.dimension_semantics<arbitrary>], iteration_bounds = array<i64: 2, 2>, scalar_prefetch = 0 : i64, scratch_operands = 4 : i64, tpu.core_type = #tpu.core_type<tc>, window_params = [{transform_indices = @transform_0, window_bounds = array<i64: 1, 256, 128>}, {transform_indices = @transform_1, window_bounds = array<i64: 1, 128, 128>}, {pipeline_mode = #tpu.pipeline_mode<synchronous>, transform_indices = @transform_2, window_bounds = array<i64: 128, 128>}, {pipeline_mode = #tpu.pipeline_mode<synchronous>, transform_indices = @transform_3, window_bounds = array<i64: 128, 128>}, {pipeline_mode = #tpu.pipeline_mode<synchronous>, transform_indices = @transform_4, window_bounds = array<i64: 1, 128>}, {transform_indices = @transform_5, window_bounds = array<i64: 1, 256, 128>}]} {
    %c0_i32 = arith.constant 0 : i32
    %0 = arith.cmpi eq, %arg1, %c0_i32 : i32
    %1 = arith.extui %0 : i1 to i32
    %c0_i32_0 = arith.constant 0 : i32
    %2 = arith.cmpi ne, %1, %c0_i32_0 : i32
    scf.if %2 {
      %c0_29 = arith.constant 0 : index
      %c0_30 = arith.constant 0 : index
      %c0_31 = arith.constant 0 : index
      %44 = vector.load %arg2[%c0_29, %c0_30, %c0_31] : memref<1x256x128xbf16, #tpu.memory_space<vmem>>, vector<1x256x128xbf16>
      %45 = vector.shape_cast %44 : vector<1x256x128xbf16> to vector<256x128xbf16>
      %c0_32 = arith.constant 0 : index
      %c0_33 = arith.constant 0 : index
      %46 = vector.load %arg4[%c0_32, %c0_33] : memref<128x128xbf16, #tpu.memory_space<vmem>>, vector<128x128xbf16>
      %cst_34 = arith.constant dense<0.000000e+00> : vector<256x128xf32>
      %47 = tpu.matmul %45, %46, %cst_34 {dimension_numbers = #tpu.dot_dimension_numbers<[1], [0], [0], [1], [0, 0, 1, 1], [], []>} : vector<256x128xbf16>, vector<128x128xbf16>, vector<256x128xf32> -> vector<256x128xf32>
      %cst_35 = arith.constant 0.297301769 : f32
      %48 = vector.broadcast %cst_35 : f32 to vector<256x128xf32>
      %49 = arith.mulf %47, %48 : vector<256x128xf32>
      %50 = arith.truncf %49 : vector<256x128xf32> to vector<256x128xbf16>
      %c0_36 = arith.constant 0 : index
      %c0_37 = arith.constant 0 : index
      %51 = vector.load %arg8[%c0_36, %c0_37] : memref<256x128xbf16, #tpu.memory_space<vmem>>, vector<256x128xbf16>
      tpu.vector_store %arg8[%c0_36, %c0_37], %50 {strides = array<i32>} : memref<256x128xbf16, #tpu.memory_space<vmem>>, vector<256x128xbf16>,
      %cst_38 = arith.constant 0xFF800000 : f32
      %52 = vector.broadcast %cst_38 : f32 to vector<256x1xf32>
      %c0_39 = arith.constant 0 : index
      %c0_40 = arith.constant 0 : index
      %53 = vector.load %arg9[%c0_39, %c0_40] : memref<256x1xf32, #tpu.memory_space<vmem>>, vector<256x1xf32>
      tpu.vector_store %arg9[%c0_39, %c0_40], %52 {strides = array<i32>} : memref<256x1xf32, #tpu.memory_space<vmem>>, vector<256x1xf32>,
      %cst_41 = arith.constant 0.000000e+00 : f32
      %54 = vector.broadcast %cst_41 : f32 to vector<256x1xf32>
      %c0_42 = arith.constant 0 : index
      %c0_43 = arith.constant 0 : index
      %55 = vector.load %arg10[%c0_42, %c0_43] : memref<256x1xf32, #tpu.memory_space<vmem>>, vector<256x1xf32>
      tpu.vector_store %arg10[%c0_42, %c0_43], %54 {strides = array<i32>} : memref<256x1xf32, #tpu.memory_space<vmem>>, vector<256x1xf32>,
      %cst_44 = arith.constant 0.000000e+00 : f32
      %56 = vector.broadcast %cst_44 : f32 to vector<256x128xf32>
      %c0_45 = arith.constant 0 : index
      %c0_46 = arith.constant 0 : index
      %57 = vector.load %arg11[%c0_45, %c0_46] : memref<256x128xf32, #tpu.memory_space<vmem>>, vector<256x128xf32>
      tpu.vector_store %arg11[%c0_45, %c0_46], %56 {strides = array<i32>} : memref<256x128xf32, #tpu.memory_space<vmem>>, vector<256x128xf32>,
    } else {
    }
    %c0 = arith.constant 0 : index
    %c0_1 = arith.constant 0 : index
    %c0_2 = arith.constant 0 : index
    %3 = vector.load %arg3[%c0, %c0_1, %c0_2] : memref<1x128x128xbf16, #tpu.memory_space<vmem>>, vector<1x128x128xbf16>
    %4 = vector.shape_cast %3 : vector<1x128x128xbf16> to vector<128x128xbf16>
    %c0_3 = arith.constant 0 : index
    %c0_4 = arith.constant 0 : index
    %5 = vector.load %arg5[%c0_3, %c0_4] : memref<128x128xbf16, #tpu.memory_space<vmem>>, vector<128x128xbf16>
    %cst = arith.constant dense<0.000000e+00> : vector<128x128xf32>
    %6 = tpu.matmul %4, %5, %cst {dimension_numbers = #tpu.dot_dimension_numbers<[1], [0], [0], [1], [0, 0, 1, 1], [], []>} : vector<128x128xbf16>, vector<128x128xbf16>, vector<128x128xf32> -> vector<128x128xf32>
    %c0_5 = arith.constant 0 : index
    %c0_6 = arith.constant 0 : index
    %7 = vector.load %arg6[%c0_5, %c0_6] : memref<1x128xf32, #tpu.memory_space<vmem>>, vector<1x128xf32>
    %8 = vector.broadcast %7 : vector<1x128xf32> to vector<128x128xf32>
    %9 = arith.addf %6, %8 : vector<128x128xf32>
    %10 = arith.truncf %9 : vector<128x128xf32> to vector<128x128xbf16>
    %c128_i32 = arith.constant 128 : i32
    %11 = arith.muli %arg1, %c128_i32 : i32
    %12 = tpu.assume_multiple %11, 128 : i32
    %13 = arith.index_cast %12 : i32 to index
    %c0_7 = arith.constant 0 : index
    %14 = vector.load %arg8[%13, %c0_7] : memref<256x128xbf16, #tpu.memory_space<vmem>>, vector<128x128xbf16>
    %c0_8 = arith.constant 0 : index
    %c0_9 = arith.constant 0 : index
    %15 = vector.load %arg8[%c0_8, %c0_9] : memref<256x128xbf16, #tpu.memory_space<vmem>>, vector<256x128xbf16>
    %cst_10 = arith.constant dense<0.000000e+00> : vector<256x128xf32>
    %16 = tpu.matmul %15, %14, %cst_10 {dimension_numbers = #tpu.dot_dimension_numbers<[1], [1], [0], [0], [0, 0, 1, 0], [], []>} : vector<256x128xbf16>, vector<128x128xbf16>, vector<256x128xf32> -> vector<256x128xf32>
    %c0_11 = arith.constant 0 : index
    %c0_12 = arith.constant 0 : index
    %17 = vector.load %arg9[%c0_11, %c0_12] : memref<256x1xf32, #tpu.memory_space<vmem>>, vector<256x1xf32>
    %cst_13 = arith.constant dense<0xFF800000> : vector<256xf32>
    %18 = vector.multi_reduction <maximumf>, %16, %cst_13 [1] : vector<256x128xf32> to vector<256xf32>
    %19 = vector.shape_cast %18 : vector<256xf32> to vector<256x1xf32>
    %20 = arith.maximumf %17, %19 : vector<256x1xf32>
    %c0_14 = arith.constant 0 : index
    %c0_15 = arith.constant 0 : index
    %21 = vector.load %arg9[%c0_14, %c0_15] : memref<256x1xf32, #tpu.memory_space<vmem>>, vector<256x1xf32>
    %22 = arith.subf %21, %20 : vector<256x1xf32>
    %23 = math.exp %22 : vector<256x1xf32>
    %24 = vector.broadcast %20 : vector<256x1xf32> to vector<256x128xf32>
    %25 = arith.subf %16, %24 : vector<256x128xf32>
    %26 = math.exp %25 : vector<256x128xf32>
    %c0_16 = arith.constant 0 : index
    %c0_17 = arith.constant 0 : index
    %27 = vector.load %arg10[%c0_16, %c0_17] : memref<256x1xf32, #tpu.memory_space<vmem>>, vector<256x1xf32>
    %28 = arith.mulf %23, %27 : vector<256x1xf32>
    %cst_18 = arith.constant dense<0.000000e+00> : vector<256xf32>
    %29 = vector.multi_reduction <add>, %26, %cst_18 [1] : vector<256x128xf32> to vector<256xf32>
    %30 = vector.shape_cast %29 : vector<256xf32> to vector<256x1xf32>
    %31 = arith.addf %28, %30 : vector<256x1xf32>
    %c0_19 = arith.constant 0 : index
    %c0_20 = arith.constant 0 : index
    %32 = vector.load %arg10[%c0_19, %c0_20] : memref<256x1xf32, #tpu.memory_space<vmem>>, vector<256x1xf32>
    tpu.vector_store %arg10[%c0_19, %c0_20], %31 {strides = array<i32>} : memref<256x1xf32, #tpu.memory_space<vmem>>, vector<256x1xf32>,
    %c0_21 = arith.constant 0 : index
    %c0_22 = arith.constant 0 : index
    %33 = vector.load %arg11[%c0_21, %c0_22] : memref<256x128xf32, #tpu.memory_space<vmem>>, vector<256x128xf32>
    %34 = vector.broadcast %23 : vector<256x1xf32> to vector<256x128xf32>
    %35 = arith.mulf %34, %33 : vector<256x128xf32>
    %36 = arith.truncf %26 : vector<256x128xf32> to vector<256x128xbf16>
    %cst_23 = arith.constant dense<0.000000e+00> : vector<256x128xf32>
    %37 = tpu.matmul %36, %10, %cst_23 {dimension_numbers = #tpu.dot_dimension_numbers<[1], [0], [0], [1], [0, 0, 1, 1], [], []>} : vector<256x128xbf16>, vector<128x128xbf16>, vector<256x128xf32> -> vector<256x128xf32>
    %38 = arith.addf %35, %37 : vector<256x128xf32>
    %c0_24 = arith.constant 0 : index
    %c0_25 = arith.constant 0 : index
    %39 = vector.load %arg11[%c0_24, %c0_25] : memref<256x128xf32, #tpu.memory_space<vmem>>, vector<256x128xf32>
    tpu.vector_store %arg11[%c0_24, %c0_25], %38 {strides = array<i32>} : memref<256x128xf32, #tpu.memory_space<vmem>>, vector<256x128xf32>,
    %c0_26 = arith.constant 0 : index
    %c0_27 = arith.constant 0 : index
    %40 = vector.load %arg9[%c0_26, %c0_27] : memref<256x1xf32, #tpu.memory_space<vmem>>, vector<256x1xf32>
    tpu.vector_store %arg9[%c0_26, %c0_27], %20 {strides = array<i32>} : memref<256x1xf32, #tpu.memory_space<vmem>>, vector<256x1xf32>,
    %c1_i32 = arith.constant 1 : i32
    %41 = arith.cmpi eq, %arg1, %c1_i32 : i32
    %42 = arith.extui %41 : i1 to i32
    %c0_i32_28 = arith.constant 0 : i32
    %43 = arith.cmpi ne, %42, %c0_i32_28 : i32
    scf.if %43 {
      %c0_29 = arith.constant 0 : index
      %c0_30 = arith.constant 0 : index
      %44 = vector.load %arg10[%c0_29, %c0_30] : memref<256x1xf32, #tpu.memory_space<vmem>>, vector<256x1xf32>
      %45 = tpu.reciprocal %44 {approx = true} : vector<256x1xf32> -> vector<256x1xf32>
      %c0_31 = arith.constant 0 : index
      %c0_32 = arith.constant 0 : index
      %46 = vector.load %arg11[%c0_31, %c0_32] : memref<256x128xf32, #tpu.memory_space<vmem>>, vector<256x128xf32>
      %47 = vector.broadcast %45 : vector<256x1xf32> to vector<256x128xf32>
      %48 = arith.mulf %46, %47 : vector<256x128xf32>
      %c0_33 = arith.constant 0 : index
      %c0_34 = arith.constant 0 : index
      %c0_35 = arith.constant 0 : index
      %49 = vector.load %arg7[%c0_33, %c0_34, %c0_35] : memref<1x256x128xf32, #tpu.memory_space<vmem>>, vector<1x256x128xf32>
      %50 = vector.shape_cast %49 : vector<1x256x128xf32> to vector<256x128xf32>
      %51 = vector.shape_cast %48 : vector<256x128xf32> to vector<1x256x128xf32>
      tpu.vector_store %arg7[%c0_33, %c0_34, %c0_35], %51 {strides = array<i32>} : memref<1x256x128xf32, #tpu.memory_space<vmem>>, vector<1x256x128xf32>,
    } else {
    }
    return
  }
  func.func @transform_0(%arg0: i32, %arg1: i32) -> (i32, i32, i32) {
    %c0_i32 = arith.constant 0 : i32
    %c0_i32_0 = arith.constant 0 : i32
    %c0_i32_1 = arith.constant 0 : i32
    return %arg0, %c0_i32, %c0_i32_0 : i32, i32, i32
  }
  func.func @transform_1(%arg0: i32, %arg1: i32) -> (i32, i32, i32) {
    %c0_i32 = arith.constant 0 : i32
    %c0_i32_0 = arith.constant 0 : i32
    return %arg0, %arg1, %c0_i32 : i32, i32, i32
  }
  func.func @transform_2(%arg0: i32, %arg1: i32) -> (i32, i32) {
    %c0_i32 = arith.constant 0 : i32
    %c0_i32_0 = arith.constant 0 : i32
    %c0_i32_1 = arith.constant 0 : i32
    return %c0_i32, %c0_i32_0 : i32, i32
  }
  func.func @transform_3(%arg0: i32, %arg1: i32) -> (i32, i32) {
    %c0_i32 = arith.constant 0 : i32
    %c0_i32_0 = arith.constant 0 : i32
    %c0_i32_1 = arith.constant 0 : i32
    return %c0_i32, %c0_i32_0 : i32, i32
  }
  func.func @transform_4(%arg0: i32, %arg1: i32) -> (i32, i32) {
    %c0_i32 = arith.constant 0 : i32
    %c0_i32_0 = arith.constant 0 : i32
    %c0_i32_1 = arith.constant 0 : i32
    return %c0_i32, %c0_i32_0 : i32, i32
  }
  func.func @transform_5(%arg0: i32, %arg1: i32) -> (i32, i32, i32) {
    %c0_i32 = arith.constant 0 : i32
    %c0_i32_0 = arith.constant 0 : i32
    %c0_i32_1 = arith.constant 0 : i32
    return %arg0, %c0_i32, %c0_i32_0 : i32, i32, i32
  }
}

</mosaic_0001>

<llo_original>
// kernel: sa_layer_forward.1
$region0: #{sa_layer_forward.1}
  #allocation0 [shape = 'u32[]', space=smem, size = 0x4, offset = 0x4, fixed_abs, tag = 'smem constant byte address 0x4 - core index']
  #allocation1 [shape = 'u32[144,128]{1,0:T(1,128)}', space=vmem, size = 0x12000, scoped, tag = 'internal scratch']
  #allocation2 [shape = 'bf16[256,128]{1,0:T(16,128)(2,1)}', space=vmem, size = 0x10000, scoped, tag = 'scratch operand']
  #allocation3 [shape = 'f32[256,1]{1,0:T(8,128)}', space=vmem, size = 0x20000, scoped, tag = 'scratch operand']
  #allocation4 [shape = 'f32[256,1]{1,0:T(8,128)}', space=vmem, size = 0x20000, scoped, tag = 'scratch operand']
  #allocation5 [shape = 'f32[256,128]{1,0:T(8,128)}', space=vmem, size = 0x20000, scoped, tag = 'scratch operand']
  %s0 = inlined_call_operand.vmem [shape: bf16[2,256,128], index: 0, kind: input, shape index: {}, may-alias: {0,1}]
  %s1 = inlined_call_operand.vmem [shape: bf16[2,256,128], index: 1, kind: input, shape index: {}, may-alias: {0,1}]
  %s2 = inlined_call_operand.vmem [shape: bf16[128,128], index: 2, kind: input, shape index: {}]
  %s3 = inlined_call_operand.vmem [shape: bf16[128,128], index: 3, kind: input, shape index: {}]
  %s4 = inlined_call_operand.vmem [shape: f32[1,128], index: 4, kind: input, shape index: {}]
  %s5 = inlined_call_operand.hbm [shape: f32[2,256,128], index: 5, kind: output, shape index: {}]
  %s6 = sld [smem:[#allocation0]]
  $region61: #{sa_layer_forward.1} parent=0
    _
  %s8 = ssub.s32 1, %s6
  %s9 = scalar_select 0, %s8, %s6
  $region1: #{sa_layer_forward.1} parent=0
    #allocation6 [shape = 'u8[262144]{0}', space=vmem, size = 0x40000, scoped, tag = 'output window, operand 0']
    #allocation7 [shape = 's32[2]{0}', space=sflag, size = 0x8, scoped, tag = 'scoped memory for sa_layer_forward.1']
    %10 = vsyncpa [#allocation7], 0
    %s11 = scalar_lea.sflag [#allocation7], 1
    %12 = vsyncpa %s11, 0
    loop: start=0, step=1, limit=6
    $region2: #{sa_layer_forward.1} parent=1 // loop_pre_header
      _
    $region3: #{sa_layer_forward.1} parent=1 // loop_header
      %s14 = sphi 0, %s18
      %p15 = scmp.ge.s32.totalorder %s14, 6
      %s21 = sphi 0, %s33
      %s22 = sphi 0, %s29
      %s23 = sphi 0, %s21
      %s24 = sphi 0, %s22
      %s25 = sphi 0, %s23
      %s26 = sphi 0, %s24
      %s36 = sphi 0, %s38
      %s39 = sphi 0, %s36
      %s40 = sphi 0, %s39
      %s56 = sphi 0, %s40
      %s64 = sphi 0, %s66
      %s67 = sphi 0, %s64
      %s68 = sphi 0, %s67
      %s84 = sphi 0, %s68
      %s88 = sphi 0, %s88
      %s90 = sphi 0, %s88
      %s91 = sphi 0, %s90
      %s105 = sphi 0, %s91
      %s109 = sphi 0, %s109
      %s111 = sphi 0, %s109
      %s112 = sphi 0, %s111
      %s126 = sphi 0, %s112
      %s130 = sphi 0, %s130
      %s132 = sphi 0, %s130
      %s133 = sphi 0, %s132
      %s147 = sphi 0, %s133
      %s153 = sphi 0, %s155
      %s156 = sphi 0, %s153
      %s157 = sphi 0, %s156
      %s173 = sphi 0, %s157
    $region4: #{sa_layer_forward.1} parent=1 // loop_header_branch
      %17 = sbr.rel (%p15) target = $region8
    $region5: #{sa_layer_forward.1} parent=1 // loop_body
      %s19 = ssub.s32 %s14, 1
      %s20 = ssub.s32 %s14, 2
      %s27 = sadd.s32 1, %s22
      %p28 = scmp.ge.s32.totalorder %s27, 2
      %s29 = scalar_select %p28, 0, %s27
      %s30 = sadd.s32 1, %s21
      %s31 = scalar_select %p28, %s30, %s21
      %p32 = scmp.ge.s32.totalorder %s31, 2
      %s33 = scalar_select %p32, 0, %s31
      %s34 = ssub.s32 %s21, %s33
      %p35 = scmp.eq.s32.totalorder %s34, 0
      %s37 = sadd.s32 %s36, 1
      %s38 = scalar_select %p35, %s36, %s37
      %p41 = pneg %p35
      %p42 = scmp.eq.s32.totalorder %s14, 3
      %p43 = por %p41, %p42
      %p44 = scmp.ne.s32.totalorder %s36, %s39
      %p45 = scmp.eq.s32.totalorder %s14, 0
      %p46 = por %p44, %p45
      %p47 = scmp.ne.s32.totalorder %s36, %s39
      %p48 = scmp.eq.s32.totalorder %s19, 3
      %p49 = por %p47, %p48
      %p50 = scmp.ne.s32.totalorder %s39, %s40
      %p51 = scmp.eq.s32.totalorder %s19, 0
      %p52 = por %p50, %p51
      %p53 = scmp.ne.s32.totalorder %s39, %s40
      %p54 = scmp.eq.s32.totalorder %s20, 3
      %p55 = por %p53, %p54
      %p57 = scmp.ne.s32.totalorder %s40, %s56
      %p58 = scmp.eq.s32.totalorder %s20, 0
      %p59 = por %p57, %p58
      %s60 = ssub.s32 %s21, %s33
      %s61 = ssub.s32 %s22, %s29
      %s62 = sor.u32 %s60, %s61
      %p63 = scmp.eq.s32.totalorder %s62, 0
      %s65 = sadd.s32 %s64, 1
      %s66 = scalar_select %p63, %s64, %s65
      %p69 = pneg %p63
      %p70 = scmp.eq.s32.totalorder %s14, 3
      %p71 = por %p69, %p70
      %p72 = scmp.ne.s32.totalorder %s64, %s67
      %p73 = scmp.eq.s32.totalorder %s14, 0
      %p74 = por %p72, %p73
      %p75 = scmp.ne.s32.totalorder %s64, %s67
      %p76 = scmp.eq.s32.totalorder %s19, 3
      %p77 = por %p75, %p76
      %p78 = scmp.ne.s32.totalorder %s67, %s68
      %p79 = scmp.eq.s32.totalorder %s19, 0
      %p80 = por %p78, %p79
      %p81 = scmp.ne.s32.totalorder %s67, %s68
      %p82 = scmp.eq.s32.totalorder %s20, 3
      %p83 = por %p81, %p82
      %p85 = scmp.ne.s32.totalorder %s68, %s84
      %p86 = scmp.eq.s32.totalorder %s20, 0
      %p87 = por %p85, %p86
      %s89 = sadd.s32 %s88, 1
      %p92 = scmp.eq.s32.totalorder %s14, 3
      %p93 = scmp.ne.s32.totalorder %s88, %s90
      %p94 = scmp.eq.s32.totalorder %s14, 0
      %p95 = por %p93, %p94
      %p96 = scmp.ne.s32.totalorder %s88, %s90
      %p97 = scmp.eq.s32.totalorder %s19, 3
      %p98 = por %p96, %p97
      %p99 = scmp.ne.s32.totalorder %s90, %s91
      %p100 = scmp.eq.s32.totalorder %s19, 0
      %p101 = por %p99, %p100
      %p102 = scmp.ne.s32.totalorder %s90, %s91
      %p103 = scmp.eq.s32.totalorder %s20, 3
      %p104 = por %p102, %p103
      %p106 = scmp.ne.s32.totalorder %s91, %s105
      %p107 = scmp.eq.s32.totalorder %s20, 0
      %p108 = por %p106, %p107
      %s110 = sadd.s32 %s109, 1
      %p113 = scmp.eq.s32.totalorder %s14, 3
      %p114 = scmp.ne.s32.totalorder %s109, %s111
      %p115 = scmp.eq.s32.totalorder %s14, 0
      %p116 = por %p114, %p115
      %p117 = scmp.ne.s32.totalorder %s109, %s111
      %p118 = scmp.eq.s32.totalorder %s19, 3
      %p119 = por %p117, %p118
      %p120 = scmp.ne.s32.totalorder %s111, %s112
      %p121 = scmp.eq.s32.totalorder %s19, 0
      %p122 = por %p120, %p121
      %p123 = scmp.ne.s32.totalorder %s111, %s112
      %p124 = scmp.eq.s32.totalorder %s20, 3
      %p125 = por %p123, %p124
      %p127 = scmp.ne.s32.totalorder %s112, %s126
      %p128 = scmp.eq.s32.totalorder %s20, 0
      %p129 = por %p127, %p128
      %s131 = sadd.s32 %s130, 1
      %p134 = scmp.eq.s32.totalorder %s14, 3
      %p135 = scmp.ne.s32.totalorder %s130, %s132
      %p136 = scmp.eq.s32.totalorder %s14, 0
      %p137 = por %p135, %p136
      %p138 = scmp.ne.s32.totalorder %s130, %s132
      %p139 = scmp.eq.s32.totalorder %s19, 3
      %p140 = por %p138, %p139
      %p141 = scmp.ne.s32.totalorder %s132, %s133
      %p142 = scmp.eq.s32.totalorder %s19, 0
      %p143 = por %p141, %p142
      %p144 = scmp.ne.s32.totalorder %s132, %s133
      %p145 = scmp.eq.s32.totalorder %s20, 3
      %p146 = por %p144, %p145
      %p148 = scmp.ne.s32.totalorder %s133, %s147
      %p149 = scmp.eq.s32.totalorder %s20, 0
      %p150 = por %p148, %p149
      %s151 = ssub.s32 %s21, %s33
      %p152 = scmp.eq.s32.totalorder %s151, 0
      %s154 = sadd.s32 %s153, 1
      %s155 = scalar_select %p152, %s153, %s154
      %p158 = pneg %p152
      %p159 = scmp.eq.s32.totalorder %s14, 3
      %p160 = por %p158, %p159
      %p161 = scmp.ne.s32.totalorder %s153, %s156
      %p162 = scmp.eq.s32.totalorder %s14, 0
      %p163 = por %p161, %p162
      %p164 = scmp.ne.s32.totalorder %s153, %s156
      %p165 = scmp.eq.s32.totalorder %s19, 3
      %p166 = por %p164, %p165
      %p167 = scmp.ne.s32.totalorder %s156, %s157
      %p168 = scmp.eq.s32.totalorder %s19, 0
      %p169 = por %p167, %p168
      %p170 = scmp.ne.s32.totalorder %s156, %s157
      %p171 = scmp.eq.s32.totalorder %s20, 3
      %p172 = por %p170, %p171
      %p174 = scmp.ne.s32.totalorder %s157, %s173
      %p175 = scmp.eq.s32.totalorder %s20, 0
      %p176 = por %p174, %p175
      %p177 = scmp.le.s32.totalorder 1, %s14
      %p178 = scmp.lt.s32.totalorder %s14, 5
      %p179 = pnand %p177, %p178
      %p180 = pneg %p179
      // Predicated region
      $region9: #{sa_layer_forward.1} parent=5 // pred_check
        _
      $region10: #{sa_layer_forward.1} parent=5 // pred_check_branch
        %182 = sbr.rel (%p179) target = $region12
      $region11: #{sa_layer_forward.1} parent=5 // pred_region
        %s183 = ssub.s32 %s14, 1
        // Predicated region
        $region13: #{sa_layer_forward.1} parent=11 // pred_check
          %p184 = pneg %p101
        $region14: #{sa_layer_forward.1} parent=11 // pred_check_branch
          %186 = sbr.rel (%p184) target = $region16
        $region15: #{sa_layer_forward.1} parent=11 // pred_region
          _
        $region16: #{sa_layer_forward.1} parent=11 // pred_fallthru
          _
        // Predicated region
        $region17: #{sa_layer_forward.1} parent=11 // pred_check
          %p187 = pneg %p122
        $region18: #{sa_layer_forward.1} parent=11 // pred_check_branch
          %189 = sbr.rel (%p187) target = $region20
        $region19: #{sa_layer_forward.1} parent=11 // pred_region
          _
        $region20: #{sa_layer_forward.1} parent=11 // pred_fallthru
          _
        // Predicated region
        $region21: #{sa_layer_forward.1} parent=11 // pred_check
          %p190 = pneg %p143
        $region22: #{sa_layer_forward.1} parent=11 // pred_check_branch
          %192 = sbr.rel (%p190) target = $region24
        $region23: #{sa_layer_forward.1} parent=11 // pred_region
          _
        $region24: #{sa_layer_forward.1} parent=11 // pred_fallthru
          _
      $region12: #{sa_layer_forward.1} parent=5 // pred_fallthru
        _
      %p193 = scmp.lt.s32.totalorder %s14, 4
      // Predicated region
      $region25: #{sa_layer_forward.1} parent=5 // pred_check
        %p194 = pneg %p193
      $region26: #{sa_layer_forward.1} parent=5 // pred_check_branch
        %196 = sbr.rel (%p194) target = $region28
      $region27: #{sa_layer_forward.1} parent=5 // pred_region
        // Predicated region
        $region29: #{sa_layer_forward.1} parent=27 // pred_check
          %p197 = pneg %p46
        $region30: #{sa_layer_forward.1} parent=27 // pred_check_branch
          %199 = sbr.rel (%p197) target = $region32
        $region31: #{sa_layer_forward.1} parent=27 // pred_region
          %p200 = scmp.lt.s32.totalorder %s21, 1
          %s201 = scalar_select %p200, %s21, 1
          %s202 = smul.addr %s201, 32
          %s203 = smul.addr %s202, 4
          %s204 = scalar_lea.vmem %s0, %s203
        $region32: #{sa_layer_forward.1} parent=27 // pred_fallthru
          _
        // Predicated region
        $region33: #{sa_layer_forward.1} parent=27 // pred_check
          %p205 = pneg %p74
        $region34: #{sa_layer_forward.1} parent=27 // pred_check_branch
          %207 = sbr.rel (%p205) target = $region36
        $region35: #{sa_layer_forward.1} parent=27 // pred_region
          %s208 = smul.u32 16, %s22
          %p209 = scmp.lt.s32.totalorder %s21, 1
          %s210 = scalar_select %p209, %s21, 1
          %p211 = scmp.lt.s32.totalorder %s208, 31
          %s212 = scalar_select %p211, %s208, 31
          %s213 = smul.addr %s210, 32
          %s214 = sadd.s32 %s212, %s213
          %s215 = smul.addr %s214, 4
          %s216 = scalar_lea.vmem %s1, %s215
          %s217 = smul.u32 16, %s22
        $region36: #{sa_layer_forward.1} parent=27 // pred_fallthru
          _
      $region28: #{sa_layer_forward.1} parent=5 // pred_fallthru
        _
      %p218 = scmp.le.s32.totalorder 1, %s14
      %p219 = scmp.lt.s32.totalorder %s14, 5
      %p220 = pnand %p218, %p219
      %p221 = pneg %p220
      // Predicated region
      $region37: #{sa_layer_forward.1} parent=5 // pred_check
        _
      $region38: #{sa_layer_forward.1} parent=5 // pred_check_branch
        %223 = sbr.rel (%p220) target = $region40
      $region39: #{sa_layer_forward.1} parent=5 // pred_region
        %s224 = ssub.s32 %s14, 1
        %p225 = scmp.lt.s32.totalorder %s23, 1
        %s226 = scalar_select %p225, %s23, 1
        %s227 = smul.addr %s226, 32
        %s228 = smul.addr %s227, 4
        %s229 = scalar_lea.vmem %s0, %s228
        %p230 = pneg %p52
        %p231 = pneg %p49
        %s232 = smul.u32 16, %s24
        %p233 = scmp.lt.s32.totalorder %s23, 1
        %s234 = scalar_select %p233, %s23, 1
        %p235 = scmp.lt.s32.totalorder %s232, 31
        %s236 = scalar_select %p235, %s232, 31
        %s237 = smul.addr %s234, 32
        %s238 = sadd.s32 %s236, %s237
        %s239 = smul.addr %s238, 4
        %s240 = scalar_lea.vmem %s1, %s239
        %p241 = pneg %p80
        %p242 = pneg %p77
        %p243 = pneg %p101
        %p244 = pneg %p98
        %p245 = pneg %p122
        %p246 = pneg %p119
        %p247 = pneg %p143
        %p248 = pneg %p140
        %p249 = pneg %p169
        %p250 = pneg %p166
        %s251 = sand.u32 %s156, 1
        %s252 = scalar_lea.sflag [#allocation7], %s251
        %s253 = sand.u32 %s156, 1
        %s254 = smul.addr %s253, 256
        %s255 = scalar_lea.vmem [#allocation6], %s254
        %p256 = scmp.lt.s32.totalorder %s23, 1
        %s257 = scalar_select %p256, %s23, 1
        %s258 = smul.addr %s257, 32
        %s259 = smul.addr %s258, 4
        %s260 = scalar_lea.vmem %s0, %s259
        %s261 = smul.u32 16, %s24
        %p262 = scmp.lt.s32.totalorder %s23, 1
        %s263 = scalar_select %p262, %s23, 1
        %p264 = scmp.lt.s32.totalorder %s261, 31
        %s265 = scalar_select %p264, %s261, 31
        %s266 = smul.addr %s263, 32
        %s267 = sadd.s32 %s265, %s266
        %s268 = smul.addr %s267, 4
        %s269 = scalar_lea.vmem %s1, %s268
        %s270 = smul.u32 16, %s24
        %p272 = scmp.eq.s32.totalorder %s24, 0
        // Predicated region
        $region41: #{sa_layer_forward.1} parent=39 // pred_check
          %p273 = pneg %p272
        $region42: #{sa_layer_forward.1} parent=39 // pred_check_branch
          %275 = sbr.rel (%p273) target = $region44
        $region43: #{sa_layer_forward.1} parent=39 // pred_region
          %v276 = vld [vmem:[%s260] sm:$0xf]
          %v277 = vld [vmem:[%s260 + $0x4] sm:$0xf]
          %v278 = vld [vmem:[%s260 + $0x8] sm:$0xf]
          %v279 = vld [vmem:[%s260 + $0xc] sm:$0xf]
          %v280 = vld [vmem:[%s260 + $0x10] sm:$0xf]
          %v281 = vld [vmem:[%s260 + $0x14] sm:$0xf]
          %v282 = vld [vmem:[%s260 + $0x18] sm:$0xf]
          %v283 = vld [vmem:[%s260 + $0x1c] sm:$0xf]
          %v284 = vld [vmem:[%s260 + $0x20] sm:$0xf]
          %v285 = vld [vmem:[%s260 + $0x24] sm:$0xf]
          %v286 = vld [vmem:[%s260 + $0x28] sm:$0xf]
          %v287 = vld [vmem:[%s260 + $0x2c] sm:$0xf]
          %v288 = vld [vmem:[%s260 + $0x30] sm:$0xf]
          %v289 = vld [vmem:[%s260 + $0x34] sm:$0xf]
          %v290 = vld [vmem:[%s260 + $0x38] sm:$0xf]
          %v291 = vld [vmem:[%s260 + $0x3c] sm:$0xf]
          %v292 = vld [vmem:[%s260 + $0x40] sm:$0xf]
          %v293 = vld [vmem:[%s260 + $0x44] sm:$0xf]
          %v294 = vld [vmem:[%s260 + $0x48] sm:$0xf]
          %v295 = vld [vmem:[%s260 + $0x4c] sm:$0xf]
          %v296 = vld [vmem:[%s260 + $0x50] sm:$0xf]
          %v297 = vld [vmem:[%s260 + $0x54] sm:$0xf]
          %v298 = vld [vmem:[%s260 + $0x58] sm:$0xf]
          %v299 = vld [vmem:[%s260 + $0x5c] sm:$0xf]
          %v300 = vld [vmem:[%s260 + $0x60] sm:$0xf]
          %v301 = vld [vmem:[%s260 + $0x64] sm:$0xf]
          %v302 = vld [vmem:[%s260 + $0x68] sm:$0xf]
          %v303 = vld [vmem:[%s260 + $0x6c] sm:$0xf]
          %v304 = vld [vmem:[%s260 + $0x70] sm:$0xf]
          %v305 = vld [vmem:[%s260 + $0x74] sm:$0xf]
          %v306 = vld [vmem:[%s260 + $0x78] sm:$0xf]
          %v307 = vld [vmem:[%s260 + $0x7c] sm:$0xf]
          %v308 = vld [vmem:[%s2] sm:$0xf]
          %v309 = vld [vmem:[%s2 + $0x4] sm:$0xf]
          %v310 = vld [vmem:[%s2 + $0x8] sm:$0xf]
          %v311 = vld [vmem:[%s2 + $0xc] sm:$0xf]
          %v312 = vld [vmem:[%s2 + $0x10] sm:$0xf]
          %v313 = vld [vmem:[%s2 + $0x14] sm:$0xf]
          %v314 = vld [vmem:[%s2 + $0x18] sm:$0xf]
          %v315 = vld [vmem:[%s2 + $0x1c] sm:$0xf]
          %v316 = vld [vmem:[%s2 + $0x20] sm:$0xf]
          %v317 = vld [vmem:[%s2 + $0x24] sm:$0xf]
          %v318 = vld [vmem:[%s2 + $0x28] sm:$0xf]
          %v319 = vld [vmem:[%s2 + $0x2c] sm:$0xf]
          %v320 = vld [vmem:[%s2 + $0x30] sm:$0xf]
          %v321 = vld [vmem:[%s2 + $0x34] sm:$0xf]
          %v322 = vld [vmem:[%s2 + $0x38] sm:$0xf]
          %v323 = vld [vmem:[%s2 + $0x3c] sm:$0xf]
          %v356 = vunpack.c.l.b16 %v276
          %v357 = vunpack.c.l.b16 %v277
          %v358 = vunpack.c.l.b16 %v278
          %v359 = vunpack.c.l.b16 %v279
          %v360 = vunpack.c.l.b16 %v280
          %v361 = vunpack.c.l.b16 %v281
          %v362 = vunpack.c.l.b16 %v282
          %v363 = vunpack.c.l.b16 %v283
          %v364 = vunpack.c.l.b16 %v284
          %v365 = vunpack.c.l.b16 %v285
          %v366 = vunpack.c.l.b16 %v286
          %v367 = vunpack.c.l.b16 %v287
          %v368 = vunpack.c.l.b16 %v288
          %v369 = vunpack.c.l.b16 %v289
          %v370 = vunpack.c.l.b16 %v290
          %v371 = vunpack.c.l.b16 %v291
          %v372 = vunpack.c.l.b16 %v292
          %v373 = vunpack.c.l.b16 %v293
          %v374 = vunpack.c.l.b16 %v294
          %v375 = vunpack.c.l.b16 %v295
          %v376 = vunpack.c.l.b16 %v296
          %v377 = vunpack.c.l.b16 %v297
          %v378 = vunpack.c.l.b16 %v298
          %v379 = vunpack.c.l.b16 %v299
          %v380 = vunpack.c.l.b16 %v300
          %v381 = vunpack.c.l.b16 %v301
          %v382 = vunpack.c.l.b16 %v302
          %v383 = vunpack.c.l.b16 %v303
          %v384 = vunpack.c.l.b16 %v304
          %v385 = vunpack.c.l.b16 %v305
          %v386 = vunpack.c.l.b16 %v306
          %v387 = vunpack.c.l.b16 %v307
          %v388 = vpack.c.b16 %v357, %v356
          %v389 = vpack.c.b16 %v359, %v358
          %v390 = vpack.c.b16 %v361, %v360
          %v391 = vpack.c.b16 %v363, %v362
          %v392 = vpack.c.b16 %v365, %v364
          %v393 = vpack.c.b16 %v367, %v366
          %v394 = vpack.c.b16 %v369, %v368
          %v395 = vpack.c.b16 %v371, %v370
          %v396 = vpack.c.b16 %v373, %v372
          %v397 = vpack.c.b16 %v375, %v374
          %v398 = vpack.c.b16 %v377, %v376
          %v399 = vpack.c.b16 %v379, %v378
          %v400 = vpack.c.b16 %v381, %v380
          %v401 = vpack.c.b16 %v383, %v382
          %v402 = vpack.c.b16 %v385, %v384
          %v403 = vpack.c.b16 %v387, %v386
          %v436 = vunpack.c.l.b16 %v308
          %v437 = vunpack.c.l.b16 %v309
          %v438 = vunpack.c.l.b16 %v310
          %v439 = vunpack.c.l.b16 %v311
          %v440 = vunpack.c.l.b16 %v312
          %v441 = vunpack.c.l.b16 %v313
          %v442 = vunpack.c.l.b16 %v314
          %v443 = vunpack.c.l.b16 %v315
          %v444 = vunpack.c.l.b16 %v316
          %v445 = vunpack.c.l.b16 %v317
          %v446 = vunpack.c.l.b16 %v318
          %v447 = vunpack.c.l.b16 %v319
          %v448 = vunpack.c.l.b16 %v320
          %v449 = vunpack.c.l.b16 %v321
          %v450 = vunpack.c.l.b16 %v322
          %v451 = vunpack.c.l.b16 %v323
          %v452 = vpack.c.b16 %v437, %v436
          %v453 = vpack.c.b16 %v439, %v438
          %v454 = vpack.c.b16 %v441, %v440
          %v455 = vpack.c.b16 %v443, %v442
          %v456 = vpack.c.b16 %v445, %v444
          %v457 = vpack.c.b16 %v447, %v446
          %v458 = vpack.c.b16 %v449, %v448
          %v459 = vpack.c.b16 %v451, %v450
          %468 = vmatprep.subr.bf16.mxu0 0
          %469 = vmatpush1.bf16.msra.mxu0 %v452
          %470 = vmatprep.subr.bf16.mxu0 0
          %471 = vmatpush1.bf16.msra.mxu0 %v453
          %472 = vmatprep.subr.bf16.mxu0 0
          %473 = vmatpush1.bf16.msra.mxu0 %v454
          %474 = vmatprep.subr.bf16.mxu0 0
          %475 = vmatpush1.bf16.msra.mxu0 %v455
          %476 = vmatprep.subr.bf16.mxu0 0
          %477 = vmatpush1.bf16.msra.mxu0 %v456
          %478 = vmatprep.subr.bf16.mxu0 0
          %479 = vmatpush1.bf16.msra.mxu0 %v457
          %480 = vmatprep.subr.bf16.mxu0 0
          %481 = vmatpush1.bf16.msra.mxu0 %v458
          %482 = vmatprep.subr.bf16.mxu0 0
          %483 = vmatpush1.bf16.msra.mxu0 %v459
          %484 = vmatprep.subr.bf16.mxu0 0
          %485 = vmatpush1.bf16.msra.mxu0 0
          %486 = vmatprep.subr.bf16.mxu0 0
          %487 = vmatpush1.bf16.msra.mxu0 0
          %488 = vmatprep.subr.bf16.mxu0 0
          %489 = vmatpush1.bf16.msra.mxu0 0
          %490 = vmatprep.subr.bf16.mxu0 0
          %491 = vmatpush1.bf16.msra.mxu0 0
          %492 = vmatprep.subr.bf16.mxu0 0
          %493 = vmatpush1.bf16.msra.mxu0 0
          %494 = vmatprep.subr.bf16.mxu0 0
          %495 = vmatpush1.bf16.msra.mxu0 0
          %496 = vmatprep.subr.bf16.mxu0 0
          %497 = vmatpush1.bf16.msra.mxu0 0
          %498 = vmatprep.subr.bf16.mxu0 0
          %499 = vmatpush1.bf16.msra.mxu0 0
          %500 = vmatprep.mubr.bf16.mxu0 0
          %501 = vmatmul.mubr.bf16.gmra.mrb[0].mxu0 %v388
          %v502 = vpop.f32.mrb[0].mxu0
          %v503 = vadd.f32 0.0, %v502
          %v504 = vpop.f32.mrb[0].mxu0
          %v505 = vpop.f32.mrb[0].mxu0
          %v506 = vadd.f32 0.0, %v505
          %v507 = vpop.f32.mrb[0].mxu0
          %508 = vmatprep.mubr.bf16.mxu0 0
          %509 = vmatmul.mubr.bf16.gmra.mrb[0].mxu0 %v389
          %v510 = vpop.f32.mrb[0].mxu0
          %v511 = vadd.f32 0.0, %v510
          %v512 = vpop.f32.mrb[0].mxu0
          %v513 = vpop.f32.mrb[0].mxu0
          %v514 = vadd.f32 0.0, %v513
          %v515 = vpop.f32.mrb[0].mxu0
          %516 = vmatprep.mubr.bf16.mxu0 0
          %517 = vmatmul.mubr.bf16.gmra.mrb[0].mxu0 %v390
          %v518 = vpop.f32.mrb[0].mxu0
          %v519 = vadd.f32 0.0, %v518
          %v520 = vpop.f32.mrb[0].mxu0
          %v521 = vpop.f32.mrb[0].mxu0
          %v522 = vadd.f32 0.0, %v521
          %v523 = vpop.f32.mrb[0].mxu0
          %524 = vmatprep.mubr.bf16.mxu0 0
          %525 = vmatmul.mubr.bf16.gmra.mrb[0].mxu0 %v391
          %v526 = vpop.f32.mrb[0].mxu0
          %v527 = vadd.f32 0.0, %v526
          %v528 = vpop.f32.mrb[0].mxu0
          %v529 = vpop.f32.mrb[0].mxu0
          %v530 = vadd.f32 0.0, %v529
          %v531 = vpop.f32.mrb[0].mxu0
          %532 = vmatprep.mubr.bf16.mxu0 0
          %533 = vmatmul.mubr.bf16.gmra.mrb[0].mxu0 %v392
          %v534 = vpop.f32.mrb[0].mxu0
          %v535 = vadd.f32 0.0, %v534
          %v536 = vpop.f32.mrb[0].mxu0
          %v537 = vpop.f32.mrb[0].mxu0
          %v538 = vadd.f32 0.0, %v537
          %v539 = vpop.f32.mrb[0].mxu0
          %540 = vmatprep.mubr.bf16.mxu0 0
          %541 = vmatmul.mubr.bf16.gmra.mrb[0].mxu0 %v393
          %v542 = vpop.f32.mrb[0].mxu0
          %v543 = vadd.f32 0.0, %v542
          %v544 = vpop.f32.mrb[0].mxu0
          %v545 = vpop.f32.mrb[0].mxu0
          %v546 = vadd.f32 0.0, %v545
          %v547 = vpop.f32.mrb[0].mxu0
          %548 = vmatprep.mubr.bf16.mxu0 0
          %549 = vmatmul.mubr.bf16.gmra.mrb[0].mxu0 %v394
          %v550 = vpop.f32.mrb[0].mxu0
          %v551 = vadd.f32 0.0, %v550
          %v552 = vpop.f32.mrb[0].mxu0
          %v553 = vpop.f32.mrb[0].mxu0
          %v554 = vadd.f32 0.0, %v553
          %v555 = vpop.f32.mrb[0].mxu0
          %556 = vmatprep.mubr.bf16.mxu0 0
          %557 = vmatmul.mubr.bf16.gmra.mrb[0].mxu0 %v395
          %v558 = vpop.f32.mrb[0].mxu0
          %v559 = vadd.f32 0.0, %v558
          %v560 = vpop.f32.mrb[0].mxu0
          %v561 = vpop.f32.mrb[0].mxu0
          %v562 = vadd.f32 0.0, %v561
          %v563 = vpop.f32.mrb[0].mxu0
          %564 = vmatprep.mubr.bf16.mxu0 0
          %565 = vmatmul.mubr.bf16.gmra.mrb[0].mxu0 %v396
          %v566 = vpop.f32.mrb[0].mxu0
          %v567 = vadd.f32 0.0, %v566
          %v568 = vpop.f32.mrb[0].mxu0
          %v569 = vpop.f32.mrb[0].mxu0
          %v570 = vadd.f32 0.0, %v569
          %v571 = vpop.f32.mrb[0].mxu0
          %572 = vmatprep.mubr.bf16.mxu0 0
          %573 = vmatmul.mubr.bf16.gmra.mrb[0].mxu0 %v397
          %v574 = vpop.f32.mrb[0].mxu0
          %v575 = vadd.f32 0.0, %v574
          %v576 = vpop.f32.mrb[0].mxu0
          %v577 = vpop.f32.mrb[0].mxu0
          %v578 = vadd.f32 0.0, %v577
          %v579 = vpop.f32.mrb[0].mxu0
          %580 = vmatprep.mubr.bf16.mxu0 0
          %581 = vmatmul.mubr.bf16.gmra.mrb[0].mxu0 %v398
          %v582 = vpop.f32.mrb[0].mxu0
          %v583 = vadd.f32 0.0, %v582
          %v584 = vpop.f32.mrb[0].mxu0
          %v585 = vpop.f32.mrb[0].mxu0
          %v586 = vadd.f32 0.0, %v585
          %v587 = vpop.f32.mrb[0].mxu0
          %588 = vmatprep.mubr.bf16.mxu0 0
          %589 = vmatmul.mubr.bf16.gmra.mrb[0].mxu0 %v399
          %v590 = vpop.f32.mrb[0].mxu0
          %v591 = vadd.f32 0.0, %v590
          %v592 = vpop.f32.mrb[0].mxu0
          %v593 = vpop.f32.mrb[0].mxu0
          %v594 = vadd.f32 0.0, %v593
          %v595 = vpop.f32.mrb[0].mxu0
          %596 = vmatprep.mubr.bf16.mxu0 0
          %597 = vmatmul.mubr.bf16.gmra.mrb[0].mxu0 %v400
          %v598 = vpop.f32.mrb[0].mxu0
          %v599 = vadd.f32 0.0, %v598
          %v600 = vpop.f32.mrb[0].mxu0
          %v601 = vpop.f32.mrb[0].mxu0
          %v602 = vadd.f32 0.0, %v601
          %v603 = vpop.f32.mrb[0].mxu0
          %604 = vmatprep.mubr.bf16.mxu0 0
          %605 = vmatmul.mubr.bf16.gmra.mrb[0].mxu0 %v401
          %v606 = vpop.f32.mrb[0].mxu0
          %v607 = vadd.f32 0.0, %v606
          %v608 = vpop.f32.mrb[0].mxu0
          %v609 = vpop.f32.mrb[0].mxu0
          %v610 = vadd.f32 0.0, %v609
          %v611 = vpop.f32.mrb[0].mxu0
          %612 = vmatprep.mubr.bf16.mxu0 0
          %613 = vmatmul.mubr.bf16.gmra.mrb[0].mxu0 %v402
          %v614 = vpop.f32.mrb[0].mxu0
          %v615 = vadd.f32 0.0, %v614
          %v616 = vpop.f32.mrb[0].mxu0
          %v617 = vpop.f32.mrb[0].mxu0
          %v618 = vadd.f32 0.0, %v617
          %v619 = vpop.f32.mrb[0].mxu0
          %620 = vmatprep.mubr.bf16.mxu0 0
          %621 = vmatmul.mubr.bf16.gmra.mrb[0].mxu0 %v403
          %v622 = vpop.f32.mrb[0].mxu0
          %v623 = vadd.f32 0.0, %v622
          %v624 = vpop.f32.mrb[0].mxu0
          %v625 = vpop.f32.mrb[0].mxu0
          %v626 = vadd.f32 0.0, %v625
          %v627 = vpop.f32.mrb[0].mxu0
          %628 = vdwg.mxu0
          %v629 = vmul.f32 %v503, 0.29730177
          %v630 = vmul.f32 %v506, 0.29730177
          %v631 = vmul.f32 %v511, 0.29730177
          %v632 = vmul.f32 %v514, 0.29730177
          %v633 = vmul.f32 %v519, 0.29730177
          %v634 = vmul.f32 %v522, 0.29730177
          %v635 = vmul.f32 %v527, 0.29730177
          %v636 = vmul.f32 %v530, 0.29730177
          %v637 = vmul.f32 %v535, 0.29730177
          %v638 = vmul.f32 %v538, 0.29730177
          %v639 = vmul.f32 %v543, 0.29730177
          %v640 = vmul.f32 %v546, 0.29730177
          %v641 = vmul.f32 %v551, 0.29730177
          %v642 = vmul.f32 %v554, 0.29730177
          %v643 = vmul.f32 %v559, 0.29730177
          %v644 = vmul.f32 %v562, 0.29730177
          %v645 = vmul.f32 %v567, 0.29730177
          %v646 = vmul.f32 %v570, 0.29730177
          %v647 = vmul.f32 %v575, 0.29730177
          %v648 = vmul.f32 %v578, 0.29730177
          %v649 = vmul.f32 %v583, 0.29730177
          %v650 = vmul.f32 %v586, 0.29730177
          %v651 = vmul.f32 %v591, 0.29730177
          %v652 = vmul.f32 %v594, 0.29730177
          %v653 = vmul.f32 %v599, 0.29730177
          %v654 = vmul.f32 %v602, 0.29730177
          %v655 = vmul.f32 %v607, 0.29730177
          %v656 = vmul.f32 %v610, 0.29730177
          %v657 = vmul.f32 %v615, 0.29730177
          %v658 = vmul.f32 %v618, 0.29730177
          %v659 = vmul.f32 %v623, 0.29730177
          %v660 = vmul.f32 %v626, 0.29730177
          %v661 = vpack.c.bf16 %v630, %v629
          %v662 = vpack.c.bf16 %v632, %v631
          %v663 = vpack.c.bf16 %v634, %v633
          %v664 = vpack.c.bf16 %v636, %v635
          %v665 = vpack.c.bf16 %v638, %v637
          %v666 = vpack.c.bf16 %v640, %v639
          %v667 = vpack.c.bf16 %v642, %v641
          %v668 = vpack.c.bf16 %v644, %v643
          %v669 = vpack.c.bf16 %v646, %v645
          %v670 = vpack.c.bf16 %v648, %v647
          %v671 = vpack.c.bf16 %v650, %v649
          %v672 = vpack.c.bf16 %v652, %v651
          %v673 = vpack.c.bf16 %v654, %v653
          %v674 = vpack.c.bf16 %v656, %v655
          %v675 = vpack.c.bf16 %v658, %v657
          %v676 = vpack.c.bf16 %v660, %v659
          %677 = vst [vmem:[#allocation2] sm:$0xff] %v661
          %678 = vst [vmem:[#allocation2 + $0x8] sm:$0xff] %v662
          %679 = vst [vmem:[#allocation2 + $0x10] sm:$0xff] %v663
          %680 = vst [vmem:[#allocation2 + $0x18] sm:$0xff] %v664
          %681 = vst [vmem:[#allocation2 + $0x20] sm:$0xff] %v665
          %682 = vst [vmem:[#allocation2 + $0x28] sm:$0xff] %v666
          %683 = vst [vmem:[#allocation2 + $0x30] sm:$0xff] %v667
          %684 = vst [vmem:[#allocation2 + $0x38] sm:$0xff] %v668
          %685 = vst [vmem:[#allocation2 + $0x40] sm:$0xff] %v669
          %686 = vst [vmem:[#allocation2 + $0x48] sm:$0xff] %v670
          %687 = vst [vmem:[#allocation2 + $0x50] sm:$0xff] %v671
          %688 = vst [vmem:[#allocation2 + $0x58] sm:$0xff] %v672
          %689 = vst [vmem:[#allocation2 + $0x60] sm:$0xff] %v673
          %690 = vst [vmem:[#allocation2 + $0x68] sm:$0xff] %v674
          %691 = vst [vmem:[#allocation2 + $0x70] sm:$0xff] %v675
          %692 = vst [vmem:[#allocation2 + $0x78] sm:$0xff] %v676
          %vm693 = vcmask 7168
          %694 = vst.msk [vmem:[#allocation3] sm:$0xff] %vm693, -inf
          %695 = vst.msk [vmem:[#allocation3 + $0x8] sm:$0xff] %vm693, -inf
          %696 = vst.msk [vmem:[#allocation3 + $0x10] sm:$0xff] %vm693, -inf
          %697 = vst.msk [vmem:[#allocation3 + $0x18] sm:$0xff] %vm693, -inf
          %698 = vst.msk [vmem:[#allocation3 + $0x20] sm:$0xff] %vm693, -inf
          %699 = vst.msk [vmem:[#allocation3 + $0x28] sm:$0xff] %vm693, -inf
          %700 = vst.msk [vmem:[#allocation3 + $0x30] sm:$0xff] %vm693, -inf
          %701 = vst.msk [vmem:[#allocation3 + $0x38] sm:$0xff] %vm693, -inf
          %702 = vst.msk [vmem:[#allocation3 + $0x40] sm:$0xff] %vm693, -inf
          %703 = vst.msk [vmem:[#allocation3 + $0x48] sm:$0xff] %vm693, -inf
          %704 = vst.msk [vmem:[#allocation3 + $0x50] sm:$0xff] %vm693, -inf
          %705 = vst.msk [vmem:[#allocation3 + $0x58] sm:$0xff] %vm693, -inf
          %706 = vst.msk [vmem:[#allocation3 + $0x60] sm:$0xff] %vm693, -inf
          %707 = vst.msk [vmem:[#allocation3 + $0x68] sm:$0xff] %vm693, -inf
          %708 = vst.msk [vmem:[#allocation3 + $0x70] sm:$0xff] %vm693, -inf
          %709 = vst.msk [vmem:[#allocation3 + $0x78] sm:$0xff] %vm693, -inf
          %710 = vst.msk [vmem:[#allocation3 + $0x80] sm:$0xff] %vm693, -inf
          %711 = vst.msk [vmem:[#allocation3 + $0x88] sm:$0xff] %vm693, -inf
          %712 = vst.msk [vmem:[#allocation3 + $0x90] sm:$0xff] %vm693, -inf
          %713 = vst.msk [vmem:[#allocation3 + $0x98] sm:$0xff] %vm693, -inf
          %714 = vst.msk [vmem:[#allocation3 + $0xa0] sm:$0xff] %vm693, -inf
          %715 = vst.msk [vmem:[#allocation3 + $0xa8] sm:$0xff] %vm693, -inf
          %716 = vst.msk [vmem:[#allocation3 + $0xb0] sm:$0xff] %vm693, -inf
          %717 = vst.msk [vmem:[#allocation3 + $0xb8] sm:$0xff] %vm693, -inf
          %718 = vst.msk [vmem:[#allocation3 + $0xc0] sm:$0xff] %vm693, -inf
          %719 = vst.msk [vmem:[#allocation3 + $0xc8] sm:$0xff] %vm693, -inf
          %720 = vst.msk [vmem:[#allocation3 + $0xd0] sm:$0xff] %vm693, -inf
          %721 = vst.msk [vmem:[#allocation3 + $0xd8] sm:$0xff] %vm693, -inf
          %722 = vst.msk [vmem:[#allocation3 + $0xe0] sm:$0xff] %vm693, -inf
          %723 = vst.msk [vmem:[#allocation3 + $0xe8] sm:$0xff] %vm693, -inf
          %724 = vst.msk [vmem:[#allocation3 + $0xf0] sm:$0xff] %vm693, -inf
          %725 = vst.msk [vmem:[#allocation3 + $0xf8] sm:$0xff] %vm693, -inf
          %726 = vst.msk [vmem:[#allocation4] sm:$0xff] %vm693, 0.0
          %727 = vst.msk [vmem:[#allocation4 + $0x8] sm:$0xff] %vm693, 0.0
          %728 = vst.msk [vmem:[#allocation4 + $0x10] sm:$0xff] %vm693, 0.0
          %729 = vst.msk [vmem:[#allocation4 + $0x18] sm:$0xff] %vm693, 0.0
          %730 = vst.msk [vmem:[#allocation4 + $0x20] sm:$0xff] %vm693, 0.0
          %731 = vst.msk [vmem:[#allocation4 + $0x28] sm:$0xff] %vm693, 0.0
          %732 = vst.msk [vmem:[#allocation4 + $0x30] sm:$0xff] %vm693, 0.0
          %733 = vst.msk [vmem:[#allocation4 + $0x38] sm:$0xff] %vm693, 0.0
          %734 = vst.msk [vmem:[#allocation4 + $0x40] sm:$0xff] %vm693, 0.0
          %735 = vst.msk [vmem:[#allocation4 + $0x48] sm:$0xff] %vm693, 0.0
          %736 = vst.msk [vmem:[#allocation4 + $0x50] sm:$0xff] %vm693, 0.0
          %737 = vst.msk [vmem:[#allocation4 + $0x58] sm:$0xff] %vm693, 0.0
          %738 = vst.msk [vmem:[#allocation4 + $0x60] sm:$0xff] %vm693, 0.0
          %739 = vst.msk [vmem:[#allocation4 + $0x68] sm:$0xff] %vm693, 0.0
          %740 = vst.msk [vmem:[#allocation4 + $0x70] sm:$0xff] %vm693, 0.0
          %741 = vst.msk [vmem:[#allocation4 + $0x78] sm:$0xff] %vm693, 0.0
          %742 = vst.msk [vmem:[#allocation4 + $0x80] sm:$0xff] %vm693, 0.0
          %743 = vst.msk [vmem:[#allocation4 + $0x88] sm:$0xff] %vm693, 0.0
          %744 = vst.msk [vmem:[#allocation4 + $0x90] sm:$0xff] %vm693, 0.0
          %745 = vst.msk [vmem:[#allocation4 + $0x98] sm:$0xff] %vm693, 0.0
          %746 = vst.msk [vmem:[#allocation4 + $0xa0] sm:$0xff] %vm693, 0.0
          %747 = vst.msk [vmem:[#allocation4 + $0xa8] sm:$0xff] %vm693, 0.0
          %748 = vst.msk [vmem:[#allocation4 + $0xb0] sm:$0xff] %vm693, 0.0
          %749 = vst.msk [vmem:[#allocation4 + $0xb8] sm:$0xff] %vm693, 0.0
          %750 = vst.msk [vmem:[#allocation4 + $0xc0] sm:$0xff] %vm693, 0.0
          %751 = vst.msk [vmem:[#allocation4 + $0xc8] sm:$0xff] %vm693, 0.0
          %752 = vst.msk [vmem:[#allocation4 + $0xd0] sm:$0xff] %vm693, 0.0
          %753 = vst.msk [vmem:[#allocation4 + $0xd8] sm:$0xff] %vm693, 0.0
          %754 = vst.msk [vmem:[#allocation4 + $0xe0] sm:$0xff] %vm693, 0.0
          %755 = vst.msk [vmem:[#allocation4 + $0xe8] sm:$0xff] %vm693, 0.0
          %756 = vst.msk [vmem:[#allocation4 + $0xf0] sm:$0xff] %vm693, 0.0
          %757 = vst.msk [vmem:[#allocation4 + $0xf8] sm:$0xff] %vm693, 0.0
          %758 = vst [vmem:[#allocation5] sm:$0xff] 0.0
          %759 = vst [vmem:[#allocation5 + $0x8] sm:$0xff] 0.0
          %760 = vst [vmem:[#allocation5 + $0x10] sm:$0xff] 0.0
          %761 = vst [vmem:[#allocation5 + $0x18] sm:$0xff] 0.0
          %762 = vst [vmem:[#allocation5 + $0x20] sm:$0xff] 0.0
          %763 = vst [vmem:[#allocation5 + $0x28] sm:$0xff] 0.0
          %764 = vst [vmem:[#allocation5 + $0x30] sm:$0xff] 0.0
          %765 = vst [vmem:[#allocation5 + $0x38] sm:$0xff] 0.0
          %766 = vst [vmem:[#allocation5 + $0x40] sm:$0xff] 0.0
          %767 = vst [vmem:[#allocation5 + $0x48] sm:$0xff] 0.0
          %768 = vst [vmem:[#allocation5 + $0x50] sm:$0xff] 0.0
          %769 = vst [vmem:[#allocation5 + $0x58] sm:$0xff] 0.0
          %770 = vst [vmem:[#allocation5 + $0x60] sm:$0xff] 0.0
          %771 = vst [vmem:[#allocation5 + $0x68] sm:$0xff] 0.0
          %772 = vst [vmem:[#allocation5 + $0x70] sm:$0xff] 0.0
          %773 = vst [vmem:[#allocation5 + $0x78] sm:$0xff] 0.0
          %774 = vst [vmem:[#allocation5 + $0x80] sm:$0xff] 0.0
          %775 = vst [vmem:[#allocation5 + $0x88] sm:$0xff] 0.0
          %776 = vst [vmem:[#allocation5 + $0x90] sm:$0xff] 0.0
          %777 = vst [vmem:[#allocation5 + $0x98] sm:$0xff] 0.0
          %778 = vst [vmem:[#allocation5 + $0xa0] sm:$0xff] 0.0
          %779 = vst [vmem:[#allocation5 + $0xa8] sm:$0xff] 0.0
          %780 = vst [vmem:[#allocation5 + $0xb0] sm:$0xff] 0.0
          %781 = vst [vmem:[#allocation5 + $0xb8] sm:$0xff] 0.0
          %782 = vst [vmem:[#allocation5 + $0xc0] sm:$0xff] 0.0
          %783 = vst [vmem:[#allocation5 + $0xc8] sm:$0xff] 0.0
          %784 = vst [vmem:[#allocation5 + $0xd0] sm:$0xff] 0.0
          %785 = vst [vmem:[#allocation5 + $0xd8] sm:$0xff] 0.0
          %786 = vst [vmem:[#allocation5 + $0xe0] sm:$0xff] 0.0
          %787 = vst [vmem:[#allocation5 + $0xe8] sm:$0xff] 0.0
          %788 = vst [vmem:[#allocation5 + $0xf0] sm:$0xff] 0.0
          %789 = vst [vmem:[#allocation5 + $0xf8] sm:$0xff] 0.0
        $region44: #{sa_layer_forward.1} parent=39 // pred_fallthru
          _
        %v790 = vld [vmem:[%s269] sm:$0xf]
        %v791 = vld [vmem:[%s269 + $0x4] sm:$0xf]
        %v792 = vld [vmem:[%s269 + $0x8] sm:$0xf]
        %v793 = vld [vmem:[%s269 + $0xc] sm:$0xf]
        %v794 = vld [vmem:[%s269 + $0x10] sm:$0xf]
        %v795 = vld [vmem:[%s269 + $0x14] sm:$0xf]
        %v796 = vld [vmem:[%s269 + $0x18] sm:$0xf]
        %v797 = vld [vmem:[%s269 + $0x1c] sm:$0xf]
        %v798 = vld [vmem:[%s269 + $0x20] sm:$0xf]
        %v799 = vld [vmem:[%s269 + $0x24] sm:$0xf]
        %v800 = vld [vmem:[%s269 + $0x28] sm:$0xf]
        %v801 = vld [vmem:[%s269 + $0x2c] sm:$0xf]
        %v802 = vld [vmem:[%s269 + $0x30] sm:$0xf]
        %v803 = vld [vmem:[%s269 + $0x34] sm:$0xf]
        %v804 = vld [vmem:[%s269 + $0x38] sm:$0xf]
        %v805 = vld [vmem:[%s269 + $0x3c] sm:$0xf]
        %v806 = vld [vmem:[%s3] sm:$0xf]
        %v807 = vld [vmem:[%s3 + $0x4] sm:$0xf]
        %v808 = vld [vmem:[%s3 + $0x8] sm:$0xf]
        %v809 = vld [vmem:[%s3 + $0xc] sm:$0xf]
        %v810 = vld [vmem:[%s3 + $0x10] sm:$0xf]
        %v811 = vld [vmem:[%s3 + $0x14] sm:$0xf]
        %v812 = vld [vmem:[%s3 + $0x18] sm:$0xf]
        %v813 = vld [vmem:[%s3 + $0x1c] sm:$0xf]
        %v814 = vld [vmem:[%s3 + $0x20] sm:$0xf]
        %v815 = vld [vmem:[%s3 + $0x24] sm:$0xf]
        %v816 = vld [vmem:[%s3 + $0x28] sm:$0xf]
        %v817 = vld [vmem:[%s3 + $0x2c] sm:$0xf]
        %v818 = vld [vmem:[%s3 + $0x30] sm:$0xf]
        %v819 = vld [vmem:[%s3 + $0x34] sm:$0xf]
        %v820 = vld [vmem:[%s3 + $0x38] sm:$0xf]
        %v821 = vld [vmem:[%s3 + $0x3c] sm:$0xf]
        %v822 = vld [vmem:[%s4] sm:$0x1]
        %v824 = vlaneseq
        %v825 = vshrl.u32 %v824, 7
        %v826 = vsub.s32 0, %v825
        %v827 = vrot.slane %v822, %v826
        %v845 = vunpack.c.l.b16 %v790
        %v846 = vunpack.c.l.b16 %v791
        %v847 = vunpack.c.l.b16 %v792
        %v848 = vunpack.c.l.b16 %v793
        %v849 = vunpack.c.l.b16 %v794
        %v850 = vunpack.c.l.b16 %v795
        %v851 = vunpack.c.l.b16 %v796
        %v852 = vunpack.c.l.b16 %v797
        %v853 = vunpack.c.l.b16 %v798
        %v854 = vunpack.c.l.b16 %v799
        %v855 = vunpack.c.l.b16 %v800
        %v856 = vunpack.c.l.b16 %v801
        %v857 = vunpack.c.l.b16 %v802
        %v858 = vunpack.c.l.b16 %v803
        %v859 = vunpack.c.l.b16 %v804
        %v860 = vunpack.c.l.b16 %v805
        %v861 = vpack.c.b16 %v846, %v845
        %v862 = vpack.c.b16 %v848, %v847
        %v863 = vpack.c.b16 %v850, %v849
        %v864 = vpack.c.b16 %v852, %v851
        %v865 = vpack.c.b16 %v854, %v853
        %v866 = vpack.c.b16 %v856, %v855
        %v867 = vpack.c.b16 %v858, %v857
        %v868 = vpack.c.b16 %v860, %v859
        %v893 = vunpack.c.l.b16 %v806
        %v894 = vunpack.c.l.b16 %v807
        %v895 = vunpack.c.l.b16 %v808
        %v896 = vunpack.c.l.b16 %v809
        %v897 = vunpack.c.l.b16 %v810
        %v898 = vunpack.c.l.b16 %v811
        %v899 = vunpack.c.l.b16 %v812
        %v900 = vunpack.c.l.b16 %v813
        %v901 = vunpack.c.l.b16 %v814
        %v902 = vunpack.c.l.b16 %v815
        %v903 = vunpack.c.l.b16 %v816
        %v904 = vunpack.c.l.b16 %v817
        %v905 = vunpack.c.l.b16 %v818
        %v906 = vunpack.c.l.b16 %v819
        %v907 = vunpack.c.l.b16 %v820
        %v908 = vunpack.c.l.b16 %v821
        %v909 = vpack.c.b16 %v894, %v893
        %v910 = vpack.c.b16 %v896, %v895
        %v911 = vpack.c.b16 %v898, %v897
        %v912 = vpack.c.b16 %v900, %v899
        %v913 = vpack.c.b16 %v902, %v901
        %v914 = vpack.c.b16 %v904, %v903
        %v915 = vpack.c.b16 %v906, %v905
        %v916 = vpack.c.b16 %v908, %v907
        %925 = vmatprep.subr.bf16.mxu0 0
        %926 = vmatpush1.bf16.msra.mxu0 %v909
        %927 = vmatprep.subr.bf16.mxu0 0
        %928 = vmatpush1.bf16.msra.mxu0 %v910
        %929 = vmatprep.subr.bf16.mxu0 0
        %930 = vmatpush1.bf16.msra.mxu0 %v911
        %931 = vmatprep.subr.bf16.mxu0 0
        %932 = vmatpush1.bf16.msra.mxu0 %v912
        %933 = vmatprep.subr.bf16.mxu0 0
        %934 = vmatpush1.bf16.msra.mxu0 %v913
        %935 = vmatprep.subr.bf16.mxu0 0
        %936 = vmatpush1.bf16.msra.mxu0 %v914
        %937 = vmatprep.subr.bf16.mxu0 0
        %938 = vmatpush1.bf16.msra.mxu0 %v915
        %939 = vmatprep.subr.bf16.mxu0 0
        %940 = vmatpush1.bf16.msra.mxu0 %v916
        %941 = vmatprep.subr.bf16.mxu0 0
        %942 = vmatpush1.bf16.msra.mxu0 0
        %943 = vmatprep.subr.bf16.mxu0 0
        %944 = vmatpush1.bf16.msra.mxu0 0
        %945 = vmatprep.subr.bf16.mxu0 0
        %946 = vmatpush1.bf16.msra.mxu0 0
        %947 = vmatprep.subr.bf16.mxu0 0
        %948 = vmatpush1.bf16.msra.mxu0 0
        %949 = vmatprep.subr.bf16.mxu0 0
        %950 = vmatpush1.bf16.msra.mxu0 0
        %951 = vmatprep.subr.bf16.mxu0 0
        %952 = vmatpush1.bf16.msra.mxu0 0
        %953 = vmatprep.subr.bf16.mxu0 0
        %954 = vmatpush1.bf16.msra.mxu0 0
        %955 = vmatprep.subr.bf16.mxu0 0
        %956 = vmatpush1.bf16.msra.mxu0 0
        %957 = vmatprep.mubr.bf16.mxu0 0
        %958 = vmatmul.mubr.bf16.gmra.mrb[0].mxu0 %v861
        %v959 = vpop.f32.mrb[0].mxu0
        %v960 = vadd.f32 %v827, %v959
        %v961 = vpop.f32.mrb[0].mxu0
        %v962 = vpop.f32.mrb[0].mxu0
        %v963 = vadd.f32 %v827, %v962
        %v964 = vpop.f32.mrb[0].mxu0
        %965 = vmatprep.mubr.bf16.mxu0 0
        %966 = vmatmul.mubr.bf16.gmra.mrb[0].mxu0 %v862
        %v967 = vpop.f32.mrb[0].mxu0
        %v968 = vadd.f32 %v827, %v967
        %v969 = vpop.f32.mrb[0].mxu0
        %v970 = vpop.f32.mrb[0].mxu0
        %v971 = vadd.f32 %v827, %v970
        %v972 = vpop.f32.mrb[0].mxu0
        %973 = vmatprep.mubr.bf16.mxu0 0
        %974 = vmatmul.mubr.bf16.gmra.mrb[0].mxu0 %v863
        %v975 = vpop.f32.mrb[0].mxu0
        %v976 = vadd.f32 %v827, %v975
        %v977 = vpop.f32.mrb[0].mxu0
        %v978 = vpop.f32.mrb[0].mxu0
        %v979 = vadd.f32 %v827, %v978
        %v980 = vpop.f32.mrb[0].mxu0
        %981 = vmatprep.mubr.bf16.mxu0 0
        %982 = vmatmul.mubr.bf16.gmra.mrb[0].mxu0 %v864
        %v983 = vpop.f32.mrb[0].mxu0
        %v984 = vadd.f32 %v827, %v983
        %v985 = vpop.f32.mrb[0].mxu0
        %v986 = vpop.f32.mrb[0].mxu0
        %v987 = vadd.f32 %v827, %v986
        %v988 = vpop.f32.mrb[0].mxu0
        %989 = vmatprep.mubr.bf16.mxu0 0
        %990 = vmatmul.mubr.bf16.gmra.mrb[0].mxu0 %v865
        %v991 = vpop.f32.mrb[0].mxu0
        %v992 = vadd.f32 %v827, %v991
        %v993 = vpop.f32.mrb[0].mxu0
        %v994 = vpop.f32.mrb[0].mxu0
        %v995 = vadd.f32 %v827, %v994
        %v996 = vpop.f32.mrb[0].mxu0
        %997 = vmatprep.mubr.bf16.mxu0 0
        %998 = vmatmul.mubr.bf16.gmra.mrb[0].mxu0 %v866
        %v999 = vpop.f32.mrb[0].mxu0
        %v1000 = vadd.f32 %v827, %v999
        %v1001 = vpop.f32.mrb[0].mxu0
        %v1002 = vpop.f32.mrb[0].mxu0
        %v1003 = vadd.f32 %v827, %v1002
        %v1004 = vpop.f32.mrb[0].mxu0
        %1005 = vmatprep.mubr.bf16.mxu0 0
        %1006 = vmatmul.mubr.bf16.gmra.mrb[0].mxu0 %v867
        %v1007 = vpop.f32.mrb[0].mxu0
        %v1008 = vadd.f32 %v827, %v1007
        %v1009 = vpop.f32.mrb[0].mxu0
        %v1010 = vpop.f32.mrb[0].mxu0
        %v1011 = vadd.f32 %v827, %v1010
        %v1012 = vpop.f32.mrb[0].mxu0
        %1013 = vmatprep.mubr.bf16.mxu0 0
        %1014 = vmatmul.mubr.bf16.gmra.mrb[0].mxu0 %v868
        %v1015 = vpop.f32.mrb[0].mxu0
        %v1016 = vadd.f32 %v827, %v1015
        %v1017 = vpop.f32.mrb[0].mxu0
        %v1018 = vpop.f32.mrb[0].mxu0
        %v1019 = vadd.f32 %v827, %v1018
        %v1020 = vpop.f32.mrb[0].mxu0
        %1021 = vdwg.mxu0
        %v1022 = vpack.c.bf16 %v963, %v960
        %v1023 = vpack.c.bf16 %v971, %v968
        %v1024 = vpack.c.bf16 %v979, %v976
        %v1025 = vpack.c.bf16 %v987, %v984
        %v1026 = vpack.c.bf16 %v995, %v992
        %v1027 = vpack.c.bf16 %v1003, %v1000
        %v1028 = vpack.c.bf16 %v1011, %v1008
        %v1029 = vpack.c.bf16 %v1019, %v1016
        %s1030 = smul.u32 %s24, 128
        %s1031 = sshra.s32 %s1030, 4
        %s1032 = sand.u32 %s1030, 15
        %s1033 = smul.addr %s1031, 8
        %s1034 = scalar_lea.vmem [#allocation2], %s1033
        %v1035 = vld [vmem:[%s1034] sm:$0xff]
        %v1036 = vld [vmem:[%s1034 + $0x8] sm:$0xff]
        %v1037 = vld [vmem:[%s1034 + $0x10] sm:$0xff]
        %v1038 = vld [vmem:[%s1034 + $0x18] sm:$0xff]
        %v1039 = vld [vmem:[%s1034 + $0x20] sm:$0xff]
        %v1040 = vld [vmem:[%s1034 + $0x28] sm:$0xff]
        %v1041 = vld [vmem:[%s1034 + $0x30] sm:$0xff]
        %v1042 = vld [vmem:[%s1034 + $0x38] sm:$0xff]
        %v1043 = vld [vmem:[#allocation2] sm:$0xff]
        %v1044 = vld [vmem:[#allocation2 + $0x8] sm:$0xff]
        %v1045 = vld [vmem:[#allocation2 + $0x10] sm:$0xff]
        %v1046 = vld [vmem:[#allocation2 + $0x18] sm:$0xff]
        %v1047 = vld [vmem:[#allocation2 + $0x20] sm:$0xff]
        %v1048 = vld [vmem:[#allocation2 + $0x28] sm:$0xff]
        %v1049 = vld [vmem:[#allocation2 + $0x30] sm:$0xff]
        %v1050 = vld [vmem:[#allocation2 + $0x38] sm:$0xff]
        %v1051 = vld [vmem:[#allocation2 + $0x40] sm:$0xff]
        %v1052 = vld [vmem:[#allocation2 + $0x48] sm:$0xff]
        %v1053 = vld [vmem:[#allocation2 + $0x50] sm:$0xff]
        %v1054 = vld [vmem:[#allocation2 + $0x58] sm:$0xff]
        %v1055 = vld [vmem:[#allocation2 + $0x60] sm:$0xff]
        %v1056 = vld [vmem:[#allocation2 + $0x68] sm:$0xff]
        %v1057 = vld [vmem:[#allocation2 + $0x70] sm:$0xff]
        %v1058 = vld [vmem:[#allocation2 + $0x78] sm:$0xff]
        %1059 = vmatprep.subr.bf16.mxu0 0
        %1060 = vmatpush1.bf16.xpose.msra.mxu0 %v1035
        %1061 = vmatprep.subr.bf16.mxu0 0
        %1062 = vmatpush1.bf16.xpose.msra.mxu0 %v1036
        %1063 = vmatprep.subr.bf16.mxu0 0
        %1064 = vmatpush1.bf16.xpose.msra.mxu0 %v1037
        %1065 = vmatprep.subr.bf16.mxu0 0
        %1066 = vmatpush1.bf16.xpose.msra.mxu0 %v1038
        %1067 = vmatprep.subr.bf16.mxu0 0
        %1068 = vmatpush1.bf16.xpose.msra.mxu0 %v1039
        %1069 = vmatprep.subr.bf16.mxu0 0
        %1070 = vmatpush1.bf16.xpose.msra.mxu0 %v1040
        %1071 = vmatprep.subr.bf16.mxu0 0
        %1072 = vmatpush1.bf16.xpose.msra.mxu0 %v1041
        %1073 = vmatprep.subr.bf16.mxu0 0
        %1074 = vmatpush1.bf16.xpose.msra.mxu0 %v1042
        %1075 = vmatprep.subr.bf16.mxu0 0
        %1076 = vmatpush1.bf16.xpose.msra.mxu0 0
        %1077 = vmatprep.subr.bf16.mxu0 0
        %1078 = vmatpush1.bf16.xpose.msra.mxu0 0
        %1079 = vmatprep.subr.bf16.mxu0 0
        %1080 = vmatpush1.bf16.xpose.msra.mxu0 0
        %1081 = vmatprep.subr.bf16.mxu0 0
        %1082 = vmatpush1.bf16.xpose.msra.mxu0 0
        %1083 = vmatprep.subr.bf16.mxu0 0
        %1084 = vmatpush1.bf16.xpose.msra.mxu0 0
        %1085 = vmatprep.subr.bf16.mxu0 0
        %1086 = vmatpush1.bf16.xpose.msra.mxu0 0
        %1087 = vmatprep.subr.bf16.mxu0 0
        %1088 = vmatpush1.bf16.xpose.msra.mxu0 0
        %1089 = vmatprep.subr.bf16.mxu0 0
        %1090 = vmatpush1.bf16.xpose.msra.mxu0 0
        %1091 = vmatprep.mubr.bf16.mxu0 0
        %1092 = vmatmul.mubr.bf16.gmra.mrb[0].mxu0 %v1043
        %v1093 = vpop.f32.mrb[0].mxu0
        %v1094 = vadd.f32 0.0, %v1093
        %v1095 = vpop.f32.mrb[0].mxu0
        %v1096 = vpop.f32.mrb[0].mxu0
        %v1097 = vadd.f32 0.0, %v1096
        %v1098 = vpop.f32.mrb[0].mxu0
        %1099 = vmatprep.mubr.bf16.mxu0 0
        %1100 = vmatmul.mubr.bf16.gmra.mrb[0].mxu0 %v1044
        %v1101 = vpop.f32.mrb[0].mxu0
        %v1102 = vadd.f32 0.0, %v1101
        %v1103 = vpop.f32.mrb[0].mxu0
        %v1104 = vpop.f32.mrb[0].mxu0
        %v1105 = vadd.f32 0.0, %v1104
        %v1106 = vpop.f32.mrb[0].mxu0
        %1107 = vmatprep.mubr.bf16.mxu0 0
        %1108 = vmatmul.mubr.bf16.gmra.mrb[0].mxu0 %v1045
        %v1109 = vpop.f32.mrb[0].mxu0
        %v1110 = vadd.f32 0.0, %v1109
        %v1111 = vpop.f32.mrb[0].mxu0
        %v1112 = vpop.f32.mrb[0].mxu0
        %v1113 = vadd.f32 0.0, %v1112
        %v1114 = vpop.f32.mrb[0].mxu0
        %1115 = vmatprep.mubr.bf16.mxu0 0
        %1116 = vmatmul.mubr.bf16.gmra.mrb[0].mxu0 %v1046
        %v1117 = vpop.f32.mrb[0].mxu0
        %v1118 = vadd.f32 0.0, %v1117
        %v1119 = vpop.f32.mrb[0].mxu0
        %v1120 = vpop.f32.mrb[0].mxu0
        %v1121 = vadd.f32 0.0, %v1120
        %v1122 = vpop.f32.mrb[0].mxu0
        %1123 = vmatprep.mubr.bf16.mxu0 0
        %1124 = vmatmul.mubr.bf16.gmra.mrb[0].mxu0 %v1047
        %v1125 = vpop.f32.mrb[0].mxu0
        %v1126 = vadd.f32 0.0, %v1125
        %v1127 = vpop.f32.mrb[0].mxu0
        %v1128 = vpop.f32.mrb[0].mxu0
        %v1129 = vadd.f32 0.0, %v1128
        %v1130 = vpop.f32.mrb[0].mxu0
        %1131 = vmatprep.mubr.bf16.mxu0 0
        %1132 = vmatmul.mubr.bf16.gmra.mrb[0].mxu0 %v1048
        %v1133 = vpop.f32.mrb[0].mxu0
        %v1134 = vadd.f32 0.0, %v1133
        %v1135 = vpop.f32.mrb[0].mxu0
        %v1136 = vpop.f32.mrb[0].mxu0
        %v1137 = vadd.f32 0.0, %v1136
        %v1138 = vpop.f32.mrb[0].mxu0
        %1139 = vmatprep.mubr.bf16.mxu0 0
        %1140 = vmatmul.mubr.bf16.gmra.mrb[0].mxu0 %v1049
        %v1141 = vpop.f32.mrb[0].mxu0
        %v1142 = vadd.f32 0.0, %v1141
        %v1143 = vpop.f32.mrb[0].mxu0
        %v1144 = vpop.f32.mrb[0].mxu0
        %v1145 = vadd.f32 0.0, %v1144
        %v1146 = vpop.f32.mrb[0].mxu0
        %1147 = vmatprep.mubr.bf16.mxu0 0
        %1148 = vmatmul.mubr.bf16.gmra.mrb[0].mxu0 %v1050
        %v1149 = vpop.f32.mrb[0].mxu0
        %v1150 = vadd.f32 0.0, %v1149
        %v1151 = vpop.f32.mrb[0].mxu0
        %v1152 = vpop.f32.mrb[0].mxu0
        %v1153 = vadd.f32 0.0, %v1152
        %v1154 = vpop.f32.mrb[0].mxu0
        %1155 = vmatprep.mubr.bf16.mxu0 0
        %1156 = vmatmul.mubr.bf16.gmra.mrb[0].mxu0 %v1051
        %v1157 = vpop.f32.mrb[0].mxu0
        %v1158 = vadd.f32 0.0, %v1157
        %v1159 = vpop.f32.mrb[0].mxu0
        %v1160 = vpop.f32.mrb[0].mxu0
        %v1161 = vadd.f32 0.0, %v1160
        %v1162 = vpop.f32.mrb[0].mxu0
        %1163 = vmatprep.mubr.bf16.mxu0 0
        %1164 = vmatmul.mubr.bf16.gmra.mrb[0].mxu0 %v1052
        %v1165 = vpop.f32.mrb[0].mxu0
        %v1166 = vadd.f32 0.0, %v1165
        %v1167 = vpop.f32.mrb[0].mxu0
        %v1168 = vpop.f32.mrb[0].mxu0
        %v1169 = vadd.f32 0.0, %v1168
        %v1170 = vpop.f32.mrb[0].mxu0
        %1171 = vmatprep.mubr.bf16.mxu0 0
        %1172 = vmatmul.mubr.bf16.gmra.mrb[0].mxu0 %v1053
        %v1173 = vpop.f32.mrb[0].mxu0
        %v1174 = vadd.f32 0.0, %v1173
        %v1175 = vpop.f32.mrb[0].mxu0
        %v1176 = vpop.f32.mrb[0].mxu0
        %v1177 = vadd.f32 0.0, %v1176
        %v1178 = vpop.f32.mrb[0].mxu0
        %1179 = vmatprep.mubr.bf16.mxu0 0
        %1180 = vmatmul.mubr.bf16.gmra.mrb[0].mxu0 %v1054
        %v1181 = vpop.f32.mrb[0].mxu0
        %v1182 = vadd.f32 0.0, %v1181
        %v1183 = vpop.f32.mrb[0].mxu0
        %v1184 = vpop.f32.mrb[0].mxu0
        %v1185 = vadd.f32 0.0, %v1184
        %v1186 = vpop.f32.mrb[0].mxu0
        %1187 = vmatprep.mubr.bf16.mxu0 0
        %1188 = vmatmul.mubr.bf16.gmra.mrb[0].mxu0 %v1055
        %v1189 = vpop.f32.mrb[0].mxu0
        %v1190 = vadd.f32 0.0, %v1189
        %v1191 = vpop.f32.mrb[0].mxu0
        %v1192 = vpop.f32.mrb[0].mxu0
        %v1193 = vadd.f32 0.0, %v1192
        %v1194 = vpop.f32.mrb[0].mxu0
        %1195 = vmatprep.mubr.bf16.mxu0 0
        %1196 = vmatmul.mubr.bf16.gmra.mrb[0].mxu0 %v1056
        %v1197 = vpop.f32.mrb[0].mxu0
        %v1198 = vadd.f32 0.0, %v1197
        %v1199 = vpop.f32.mrb[0].mxu0
        %v1200 = vpop.f32.mrb[0].mxu0
        %v1201 = vadd.f32 0.0, %v1200
        %v1202 = vpop.f32.mrb[0].mxu0
        %1203 = vmatprep.mubr.bf16.mxu0 0
        %1204 = vmatmul.mubr.bf16.gmra.mrb[0].mxu0 %v1057
        %v1205 = vpop.f32.mrb[0].mxu0
        %v1206 = vadd.f32 0.0, %v1205
        %v1207 = vpop.f32.mrb[0].mxu0
        %v1208 = vpop.f32.mrb[0].mxu0
        %v1209 = vadd.f32 0.0, %v1208
        %v1210 = vpop.f32.mrb[0].mxu0
        %1211 = vmatprep.mubr.bf16.mxu0 0
        %1212 = vmatmul.mubr.bf16.gmra.mrb[0].mxu0 %v1058
        %v1213 = vpop.f32.mrb[0].mxu0
        %v1214 = vadd.f32 0.0, %v1213
        %v1215 = vpop.f32.mrb[0].mxu0
        %v1216 = vpop.f32.mrb[0].mxu0
        %v1217 = vadd.f32 0.0, %v1216
        %v1218 = vpop.f32.mrb[0].mxu0
        %1219 = vdwg.mxu0
        %v1220 = vld [vmem:[#allocation3] sm:$0xff]
        %v1221 = vld [vmem:[#allocation3 + $0x8] sm:$0xff]
        %v1222 = vld [vmem:[#allocation3 + $0x10] sm:$0xff]
        %v1223 = vld [vmem:[#allocation3 + $0x18] sm:$0xff]
        %v1224 = vld [vmem:[#allocation3 + $0x20] sm:$0xff]
        %v1225 = vld [vmem:[#allocation3 + $0x28] sm:$0xff]
        %v1226 = vld [vmem:[#allocation3 + $0x30] sm:$0xff]
        %v1227 = vld [vmem:[#allocation3 + $0x38] sm:$0xff]
        %v1228 = vld [vmem:[#allocation3 + $0x40] sm:$0xff]
        %v1229 = vld [vmem:[#allocation3 + $0x48] sm:$0xff]
        %v1230 = vld [vmem:[#allocation3 + $0x50] sm:$0xff]
        %v1231 = vld [vmem:[#allocation3 + $0x58] sm:$0xff]
        %v1232 = vld [vmem:[#allocation3 + $0x60] sm:$0xff]
        %v1233 = vld [vmem:[#allocation3 + $0x68] sm:$0xff]
        %v1234 = vld [vmem:[#allocation3 + $0x70] sm:$0xff]
        %v1235 = vld [vmem:[#allocation3 + $0x78] sm:$0xff]
        %v1236 = vld [vmem:[#allocation3 + $0x80] sm:$0xff]
        %v1237 = vld [vmem:[#allocation3 + $0x88] sm:$0xff]
        %v1238 = vld [vmem:[#allocation3 + $0x90] sm:$0xff]
        %v1239 = vld [vmem:[#allocation3 + $0x98] sm:$0xff]
        %v1240 = vld [vmem:[#allocation3 + $0xa0] sm:$0xff]
        %v1241 = vld [vmem:[#allocation3 + $0xa8] sm:$0xff]
        %v1242 = vld [vmem:[#allocation3 + $0xb0] sm:$0xff]
        %v1243 = vld [vmem:[#allocation3 + $0xb8] sm:$0xff]
        %v1244 = vld [vmem:[#allocation3 + $0xc0] sm:$0xff]
        %v1245 = vld [vmem:[#allocation3 + $0xc8] sm:$0xff]
        %v1246 = vld [vmem:[#allocation3 + $0xd0] sm:$0xff]
        %v1247 = vld [vmem:[#allocation3 + $0xd8] sm:$0xff]
        %v1248 = vld [vmem:[#allocation3 + $0xe0] sm:$0xff]
        %v1249 = vld [vmem:[#allocation3 + $0xe8] sm:$0xff]
        %v1250 = vld [vmem:[#allocation3 + $0xf0] sm:$0xff]
        %v1251 = vld [vmem:[#allocation3 + $0xf8] sm:$0xff]
        %1252 = vmax.xlane.f32.xlu0 %v1094
        %v1253 = vpop.xlane.xlu0 %1252
        %1254 = vmax.xlane.f32.xlu0 %v1097
        %v1255 = vpop.xlane.xlu0 %1254
        %1256 = vmax.xlane.f32.xlu0 %v1102
        %v1257 = vpop.xlane.xlu0 %1256
        %1258 = vmax.xlane.f32.xlu0 %v1105
        %v1259 = vpop.xlane.xlu0 %1258
        %1260 = vmax.xlane.f32.xlu0 %v1110
        %v1261 = vpop.xlane.xlu0 %1260
        %1262 = vmax.xlane.f32.xlu0 %v1113
        %v1263 = vpop.xlane.xlu0 %1262
        %1264 = vmax.xlane.f32.xlu0 %v1118
        %v1265 = vpop.xlane.xlu0 %1264
        %1266 = vmax.xlane.f32.xlu0 %v1121
        %v1267 = vpop.xlane.xlu0 %1266
        %1268 = vmax.xlane.f32.xlu0 %v1126
        %v1269 = vpop.xlane.xlu0 %1268
        %1270 = vmax.xlane.f32.xlu0 %v1129
        %v1271 = vpop.xlane.xlu0 %1270
        %1272 = vmax.xlane.f32.xlu0 %v1134
        %v1273 = vpop.xlane.xlu0 %1272
        %1274 = vmax.xlane.f32.xlu0 %v1137
        %v1275 = vpop.xlane.xlu0 %1274
        %1276 = vmax.xlane.f32.xlu0 %v1142
        %v1277 = vpop.xlane.xlu0 %1276
        %1278 = vmax.xlane.f32.xlu0 %v1145
        %v1279 = vpop.xlane.xlu0 %1278
        %1280 = vmax.xlane.f32.xlu0 %v1150
        %v1281 = vpop.xlane.xlu0 %1280
        %1282 = vmax.xlane.f32.xlu0 %v1153
        %v1283 = vpop.xlane.xlu0 %1282
        %1284 = vmax.xlane.f32.xlu0 %v1158
        %v1285 = vpop.xlane.xlu0 %1284
        %1286 = vmax.xlane.f32.xlu0 %v1161
        %v1287 = vpop.xlane.xlu0 %1286
        %1288 = vmax.xlane.f32.xlu0 %v1166
        %v1289 = vpop.xlane.xlu0 %1288
        %1290 = vmax.xlane.f32.xlu0 %v1169
        %v1291 = vpop.xlane.xlu0 %1290
        %1292 = vmax.xlane.f32.xlu0 %v1174
        %v1293 = vpop.xlane.xlu0 %1292
        %1294 = vmax.xlane.f32.xlu0 %v1177
        %v1295 = vpop.xlane.xlu0 %1294
        %1296 = vmax.xlane.f32.xlu0 %v1182
        %v1297 = vpop.xlane.xlu0 %1296
        %1298 = vmax.xlane.f32.xlu0 %v1185
        %v1299 = vpop.xlane.xlu0 %1298
        %1300 = vmax.xlane.f32.xlu0 %v1190
        %v1301 = vpop.xlane.xlu0 %1300
        %1302 = vmax.xlane.f32.xlu0 %v1193
        %v1303 = vpop.xlane.xlu0 %1302
        %1304 = vmax.xlane.f32.xlu0 %v1198
        %v1305 = vpop.xlane.xlu0 %1304
        %1306 = vmax.xlane.f32.xlu0 %v1201
        %v1307 = vpop.xlane.xlu0 %1306
        %1308 = vmax.xlane.f32.xlu0 %v1206
        %v1309 = vpop.xlane.xlu0 %1308
        %1310 = vmax.xlane.f32.xlu0 %v1209
        %v1311 = vpop.xlane.xlu0 %1310
        %1312 = vmax.xlane.f32.xlu0 %v1214
        %v1313 = vpop.xlane.xlu0 %1312
        %1314 = vmax.xlane.f32.xlu0 %v1217
        %v1315 = vpop.xlane.xlu0 %1314
        %v1316 = vmax.f32 %v1220, %v1253
        %v1317 = vmax.f32 %v1221, %v1255
        %v1318 = vmax.f32 %v1222, %v1257
        %v1319 = vmax.f32 %v1223, %v1259
        %v1320 = vmax.f32 %v1224, %v1261
        %v1321 = vmax.f32 %v1225, %v1263
        %v1322 = vmax.f32 %v1226, %v1265
        %v1323 = vmax.f32 %v1227, %v1267
        %v1324 = vmax.f32 %v1228, %v1269
        %v1325 = vmax.f32 %v1229, %v1271
        %v1326 = vmax.f32 %v1230, %v1273
        %v1327 = vmax.f32 %v1231, %v1275
        %v1328 = vmax.f32 %v1232, %v1277
        %v1329 = vmax.f32 %v1233, %v1279
        %v1330 = vmax.f32 %v1234, %v1281
        %v1331 = vmax.f32 %v1235, %v1283
        %v1332 = vmax.f32 %v1236, %v1285
        %v1333 = vmax.f32 %v1237, %v1287
        %v1334 = vmax.f32 %v1238, %v1289
        %v1335 = vmax.f32 %v1239, %v1291
        %v1336 = vmax.f32 %v1240, %v1293
        %v1337 = vmax.f32 %v1241, %v1295
        %v1338 = vmax.f32 %v1242, %v1297
        %v1339 = vmax.f32 %v1243, %v1299
        %v1340 = vmax.f32 %v1244, %v1301
        %v1341 = vmax.f32 %v1245, %v1303
        %v1342 = vmax.f32 %v1246, %v1305
        %v1343 = vmax.f32 %v1247, %v1307
        %v1344 = vmax.f32 %v1248, %v1309
        %v1345 = vmax.f32 %v1249, %v1311
        %v1346 = vmax.f32 %v1250, %v1313
        %v1347 = vmax.f32 %v1251, %v1315
        %v1348 = vsub.f32 %v1220, %v1316
        %v1349 = vsub.f32 %v1221, %v1317
        %v1350 = vsub.f32 %v1222, %v1318
        %v1351 = vsub.f32 %v1223, %v1319
        %v1352 = vsub.f32 %v1224, %v1320
        %v1353 = vsub.f32 %v1225, %v1321
        %v1354 = vsub.f32 %v1226, %v1322
        %v1355 = vsub.f32 %v1227, %v1323
        %v1356 = vsub.f32 %v1228, %v1324
        %v1357 = vsub.f32 %v1229, %v1325
        %v1358 = vsub.f32 %v1230, %v1326
        %v1359 = vsub.f32 %v1231, %v1327
        %v1360 = vsub.f32 %v1232, %v1328
        %v1361 = vsub.f32 %v1233, %v1329
        %v1362 = vsub.f32 %v1234, %v1330
        %v1363 = vsub.f32 %v1235, %v1331
        %v1364 = vsub.f32 %v1236, %v1332
        %v1365 = vsub.f32 %v1237, %v1333
        %v1366 = vsub.f32 %v1238, %v1334
        %v1367 = vsub.f32 %v1239, %v1335
        %v1368 = vsub.f32 %v1240, %v1336
        %v1369 = vsub.f32 %v1241, %v1337
        %v1370 = vsub.f32 %v1242, %v1338
        %v1371 = vsub.f32 %v1243, %v1339
        %v1372 = vsub.f32 %v1244, %v1340
        %v1373 = vsub.f32 %v1245, %v1341
        %v1374 = vsub.f32 %v1246, %v1342
        %v1375 = vsub.f32 %v1247, %v1343
        %v1376 = vsub.f32 %v1248, %v1344
        %v1377 = vsub.f32 %v1249, %v1345
        %v1378 = vsub.f32 %v1250, %v1346
        %v1379 = vsub.f32 %v1251, %v1347
        %v1380 = vmul.f32 %v1348, 1.442695
        %v1381 = vpow.pop %v1380
        %v1382 = vmul.f32 %v1349, 1.442695
        %v1383 = vpow.pop %v1382
        %v1384 = vmul.f32 %v1350, 1.442695
        %v1385 = vpow.pop %v1384
        %v1386 = vmul.f32 %v1351, 1.442695
        %v1387 = vpow.pop %v1386
        %v1388 = vmul.f32 %v1352, 1.442695
        %v1389 = vpow.pop %v1388
        %v1390 = vmul.f32 %v1353, 1.442695
        %v1391 = vpow.pop %v1390
        %v1392 = vmul.f32 %v1354, 1.442695
        %v1393 = vpow.pop %v1392
        %v1394 = vmul.f32 %v1355, 1.442695
        %v1395 = vpow.pop %v1394
        %v1396 = vmul.f32 %v1356, 1.442695
        %v1397 = vpow.pop %v1396
        %v1398 = vmul.f32 %v1357, 1.442695
        %v1399 = vpow.pop %v1398
        %v1400 = vmul.f32 %v1358, 1.442695
        %v1401 = vpow.pop %v1400
        %v1402 = vmul.f32 %v1359, 1.442695
        %v1403 = vpow.pop %v1402
        %v1404 = vmul.f32 %v1360, 1.442695
        %v1405 = vpow.pop %v1404
        %v1406 = vmul.f32 %v1361, 1.442695
        %v1407 = vpow.pop %v1406
        %v1408 = vmul.f32 %v1362, 1.442695
        %v1409 = vpow.pop %v1408
        %v1410 = vmul.f32 %v1363, 1.442695
        %v1411 = vpow.pop %v1410
        %v1412 = vmul.f32 %v1364, 1.442695
        %v1413 = vpow.pop %v1412
        %v1414 = vmul.f32 %v1365, 1.442695
        %v1415 = vpow.pop %v1414
        %v1416 = vmul.f32 %v1366, 1.442695
        %v1417 = vpow.pop %v1416
        %v1418 = vmul.f32 %v1367, 1.442695
        %v1419 = vpow.pop %v1418
        %v1420 = vmul.f32 %v1368, 1.442695
        %v1421 = vpow.pop %v1420
        %v1422 = vmul.f32 %v1369, 1.442695
        %v1423 = vpow.pop %v1422
        %v1424 = vmul.f32 %v1370, 1.442695
        %v1425 = vpow.pop %v1424
        %v1426 = vmul.f32 %v1371, 1.442695
        %v1427 = vpow.pop %v1426
        %v1428 = vmul.f32 %v1372, 1.442695
        %v1429 = vpow.pop %v1428
        %v1430 = vmul.f32 %v1373, 1.442695
        %v1431 = vpow.pop %v1430
        %v1432 = vmul.f32 %v1374, 1.442695
        %v1433 = vpow.pop %v1432
        %v1434 = vmul.f32 %v1375, 1.442695
        %v1435 = vpow.pop %v1434
        %v1436 = vmul.f32 %v1376, 1.442695
        %v1437 = vpow.pop %v1436
        %v1438 = vmul.f32 %v1377, 1.442695
        %v1439 = vpow.pop %v1438
        %v1440 = vmul.f32 %v1378, 1.442695
        %v1441 = vpow.pop %v1440
        %v1442 = vmul.f32 %v1379, 1.442695
        %v1443 = vpow.pop %v1442
        %1445 = vset.pattern.permute.xlu0 0
        %1446 = vperm.xlu0 %1445, %v1316
        %v1447 = vpop.permute.xlu0 %1446
        %1450 = vset.pattern.permute.xlu0 0
        %1451 = vperm.xlu0 %1450, %v1317
        %v1452 = vpop.permute.xlu0 %1451
        %1455 = vset.pattern.permute.xlu0 0
        %1456 = vperm.xlu0 %1455, %v1318
        %v1457 = vpop.permute.xlu0 %1456
        %1460 = vset.pattern.permute.xlu0 0
        %1461 = vperm.xlu0 %1460, %v1319
        %v1462 = vpop.permute.xlu0 %1461
        %1465 = vset.pattern.permute.xlu0 0
        %1466 = vperm.xlu0 %1465, %v1320
        %v1467 = vpop.permute.xlu0 %1466
        %1470 = vset.pattern.permute.xlu0 0
        %1471 = vperm.xlu0 %1470, %v1321
        %v1472 = vpop.permute.xlu0 %1471
        %1475 = vset.pattern.permute.xlu0 0
        %1476 = vperm.xlu0 %1475, %v1322
        %v1477 = vpop.permute.xlu0 %1476
        %1480 = vset.pattern.permute.xlu0 0
        %1481 = vperm.xlu0 %1480, %v1323
        %v1482 = vpop.permute.xlu0 %1481
        %1485 = vset.pattern.permute.xlu0 0
        %1486 = vperm.xlu0 %1485, %v1324
        %v1487 = vpop.permute.xlu0 %1486
        %1490 = vset.pattern.permute.xlu0 0
        %1491 = vperm.xlu0 %1490, %v1325
        %v1492 = vpop.permute.xlu0 %1491
        %1495 = vset.pattern.permute.xlu0 0
        %1496 = vperm.xlu0 %1495, %v1326
        %v1497 = vpop.permute.xlu0 %1496
        %1500 = vset.pattern.permute.xlu0 0
        %1501 = vperm.xlu0 %1500, %v1327
        %v1502 = vpop.permute.xlu0 %1501
        %1505 = vset.pattern.permute.xlu0 0
        %1506 = vperm.xlu0 %1505, %v1328
        %v1507 = vpop.permute.xlu0 %1506
        %1510 = vset.pattern.permute.xlu0 0
        %1511 = vperm.xlu0 %1510, %v1329
        %v1512 = vpop.permute.xlu0 %1511
        %1515 = vset.pattern.permute.xlu0 0
        %1516 = vperm.xlu0 %1515, %v1330
        %v1517 = vpop.permute.xlu0 %1516
        %1520 = vset.pattern.permute.xlu0 0
        %1521 = vperm.xlu0 %1520, %v1331
        %v1522 = vpop.permute.xlu0 %1521
        %1525 = vset.pattern.permute.xlu0 0
        %1526 = vperm.xlu0 %1525, %v1332
        %v1527 = vpop.permute.xlu0 %1526
        %1530 = vset.pattern.permute.xlu0 0
        %1531 = vperm.xlu0 %1530, %v1333
        %v1532 = vpop.permute.xlu0 %1531
        %1535 = vset.pattern.permute.xlu0 0
        %1536 = vperm.xlu0 %1535, %v1334
        %v1537 = vpop.permute.xlu0 %1536
        %1540 = vset.pattern.permute.xlu0 0
        %1541 = vperm.xlu0 %1540, %v1335
        %v1542 = vpop.permute.xlu0 %1541
        %1545 = vset.pattern.permute.xlu0 0
        %1546 = vperm.xlu0 %1545, %v1336
        %v1547 = vpop.permute.xlu0 %1546
        %1550 = vset.pattern.permute.xlu0 0
        %1551 = vperm.xlu0 %1550, %v1337
        %v1552 = vpop.permute.xlu0 %1551
        %1555 = vset.pattern.permute.xlu0 0
        %1556 = vperm.xlu0 %1555, %v1338
        %v1557 = vpop.permute.xlu0 %1556
        %1560 = vset.pattern.permute.xlu0 0
        %1561 = vperm.xlu0 %1560, %v1339
        %v1562 = vpop.permute.xlu0 %1561
        %1565 = vset.pattern.permute.xlu0 0
        %1566 = vperm.xlu0 %1565, %v1340
        %v1567 = vpop.permute.xlu0 %1566
        %1570 = vset.pattern.permute.xlu0 0
        %1571 = vperm.xlu0 %1570, %v1341
        %v1572 = vpop.permute.xlu0 %1571
        %1575 = vset.pattern.permute.xlu0 0
        %1576 = vperm.xlu0 %1575, %v1342
        %v1577 = vpop.permute.xlu0 %1576
        %1580 = vset.pattern.permute.xlu0 0
        %1581 = vperm.xlu0 %1580, %v1343
        %v1582 = vpop.permute.xlu0 %1581
        %1585 = vset.pattern.permute.xlu0 0
        %1586 = vperm.xlu0 %1585, %v1344
        %v1587 = vpop.permute.xlu0 %1586
        %1590 = vset.pattern.permute.xlu0 0
        %1591 = vperm.xlu0 %1590, %v1345
        %v1592 = vpop.permute.xlu0 %1591
        %1595 = vset.pattern.permute.xlu0 0
        %1596 = vperm.xlu0 %1595, %v1346
        %v1597 = vpop.permute.xlu0 %1596
        %1600 = vset.pattern.permute.xlu0 0
        %1601 = vperm.xlu0 %1600, %v1347
        %v1602 = vpop.permute.xlu0 %1601
        %v1604 = vsub.f32 %v1094, %v1447
        %v1605 = vsub.f32 %v1097, %v1452
        %v1606 = vsub.f32 %v1102, %v1457
        %v1607 = vsub.f32 %v1105, %v1462
        %v1608 = vsub.f32 %v1110, %v1467
        %v1609 = vsub.f32 %v1113, %v1472
        %v1610 = vsub.f32 %v1118, %v1477
        %v1611 = vsub.f32 %v1121, %v1482
        %v1612 = vsub.f32 %v1126, %v1487
        %v1613 = vsub.f32 %v1129, %v1492
        %v1614 = vsub.f32 %v1134, %v1497
        %v1615 = vsub.f32 %v1137, %v1502
        %v1616 = vsub.f32 %v1142, %v1507
        %v1617 = vsub.f32 %v1145, %v1512
        %v1618 = vsub.f32 %v1150, %v1517
        %v1619 = vsub.f32 %v1153, %v1522
        %v1620 = vsub.f32 %v1158, %v1527
        %v1621 = vsub.f32 %v1161, %v1532
        %v1622 = vsub.f32 %v1166, %v1537
        %v1623 = vsub.f32 %v1169, %v1542
        %v1624 = vsub.f32 %v1174, %v1547
        %v1625 = vsub.f32 %v1177, %v1552
        %v1626 = vsub.f32 %v1182, %v1557
        %v1627 = vsub.f32 %v1185, %v1562
        %v1628 = vsub.f32 %v1190, %v1567
        %v1629 = vsub.f32 %v1193, %v1572
        %v1630 = vsub.f32 %v1198, %v1577
        %v1631 = vsub.f32 %v1201, %v1582
        %v1632 = vsub.f32 %v1206, %v1587
        %v1633 = vsub.f32 %v1209, %v1592
        %v1634 = vsub.f32 %v1214, %v1597
        %v1635 = vsub.f32 %v1217, %v1602
        %v1636 = vmul.f32 %v1604, 1.442695
        %v1637 = vpow.pop %v1636
        %v1638 = vmul.f32 %v1605, 1.442695
        %v1639 = vpow.pop %v1638
        %v1640 = vmul.f32 %v1606, 1.442695
        %v1641 = vpow.pop %v1640
        %v1642 = vmul.f32 %v1607, 1.442695
        %v1643 = vpow.pop %v1642
        %v1644 = vmul.f32 %v1608, 1.442695
        %v1645 = vpow.pop %v1644
        %v1646 = vmul.f32 %v1609, 1.442695
        %v1647 = vpow.pop %v1646
        %v1648 = vmul.f32 %v1610, 1.442695
        %v1649 = vpow.pop %v1648
        %v1650 = vmul.f32 %v1611, 1.442695
        %v1651 = vpow.pop %v1650
        %v1652 = vmul.f32 %v1612, 1.442695
        %v1653 = vpow.pop %v1652
        %v1654 = vmul.f32 %v1613, 1.442695
        %v1655 = vpow.pop %v1654
        %v1656 = vmul.f32 %v1614, 1.442695
        %v1657 = vpow.pop %v1656
        %v1658 = vmul.f32 %v1615, 1.442695
        %v1659 = vpow.pop %v1658
        %v1660 = vmul.f32 %v1616, 1.442695
        %v1661 = vpow.pop %v1660
        %v1662 = vmul.f32 %v1617, 1.442695
        %v1663 = vpow.pop %v1662
        %v1664 = vmul.f32 %v1618, 1.442695
        %v1665 = vpow.pop %v1664
        %v1666 = vmul.f32 %v1619, 1.442695
        %v1667 = vpow.pop %v1666
        %v1668 = vmul.f32 %v1620, 1.442695
        %v1669 = vpow.pop %v1668
        %v1670 = vmul.f32 %v1621, 1.442695
        %v1671 = vpow.pop %v1670
        %v1672 = vmul.f32 %v1622, 1.442695
        %v1673 = vpow.pop %v1672
        %v1674 = vmul.f32 %v1623, 1.442695
        %v1675 = vpow.pop %v1674
        %v1676 = vmul.f32 %v1624, 1.442695
        %v1677 = vpow.pop %v1676
        %v1678 = vmul.f32 %v1625, 1.442695
        %v1679 = vpow.pop %v1678
        %v1680 = vmul.f32 %v1626, 1.442695
        %v1681 = vpow.pop %v1680
        %v1682 = vmul.f32 %v1627, 1.442695
        %v1683 = vpow.pop %v1682
        %v1684 = vmul.f32 %v1628, 1.442695
        %v1685 = vpow.pop %v1684
        %v1686 = vmul.f32 %v1629, 1.442695
        %v1687 = vpow.pop %v1686
        %v1688 = vmul.f32 %v1630, 1.442695
        %v1689 = vpow.pop %v1688
        %v1690 = vmul.f32 %v1631, 1.442695
        %v1691 = vpow.pop %v1690
        %v1692 = vmul.f32 %v1632, 1.442695
        %v1693 = vpow.pop %v1692
        %v1694 = vmul.f32 %v1633, 1.442695
        %v1695 = vpow.pop %v1694
        %v1696 = vmul.f32 %v1634, 1.442695
        %v1697 = vpow.pop %v1696
        %v1698 = vmul.f32 %v1635, 1.442695
        %v1699 = vpow.pop %v1698
        %v1700 = vld [vmem:[#allocation4] sm:$0xff]
        %v1701 = vld [vmem:[#allocation4 + $0x8] sm:$0xff]
        %v1702 = vld [vmem:[#allocation4 + $0x10] sm:$0xff]
        %v1703 = vld [vmem:[#allocation4 + $0x18] sm:$0xff]
        %v1704 = vld [vmem:[#allocation4 + $0x20] sm:$0xff]
        %v1705 = vld [vmem:[#allocation4 + $0x28] sm:$0xff]
        %v1706 = vld [vmem:[#allocation4 + $0x30] sm:$0xff]
        %v1707 = vld [vmem:[#allocation4 + $0x38] sm:$0xff]
        %v1708 = vld [vmem:[#allocation4 + $0x40] sm:$0xff]
        %v1709 = vld [vmem:[#allocation4 + $0x48] sm:$0xff]
        %v1710 = vld [vmem:[#allocation4 + $0x50] sm:$0xff]
        %v1711 = vld [vmem:[#allocation4 + $0x58] sm:$0xff]
        %v1712 = vld [vmem:[#allocation4 + $0x60] sm:$0xff]
        %v1713 = vld [vmem:[#allocation4 + $0x68] sm:$0xff]
        %v1714 = vld [vmem:[#allocation4 + $0x70] sm:$0xff]
        %v1715 = vld [vmem:[#allocation4 + $0x78] sm:$0xff]
        %v1716 = vld [vmem:[#allocation4 + $0x80] sm:$0xff]
        %v1717 = vld [vmem:[#allocation4 + $0x88] sm:$0xff]
        %v1718 = vld [vmem:[#allocation4 + $0x90] sm:$0xff]
        %v1719 = vld [vmem:[#allocation4 + $0x98] sm:$0xff]
        %v1720 = vld [vmem:[#allocation4 + $0xa0] sm:$0xff]
        %v1721 = vld [vmem:[#allocation4 + $0xa8] sm:$0xff]
        %v1722 = vld [vmem:[#allocation4 + $0xb0] sm:$0xff]
        %v1723 = vld [vmem:[#allocation4 + $0xb8] sm:$0xff]
        %v1724 = vld [vmem:[#allocation4 + $0xc0] sm:$0xff]
        %v1725 = vld [vmem:[#allocation4 + $0xc8] sm:$0xff]
        %v1726 = vld [vmem:[#allocation4 + $0xd0] sm:$0xff]
        %v1727 = vld [vmem:[#allocation4 + $0xd8] sm:$0xff]
        %v1728 = vld [vmem:[#allocation4 + $0xe0] sm:$0xff]
        %v1729 = vld [vmem:[#allocation4 + $0xe8] sm:$0xff]
        %v1730 = vld [vmem:[#allocation4 + $0xf0] sm:$0xff]
        %v1731 = vld [vmem:[#allocation4 + $0xf8] sm:$0xff]
        %v1732 = vmul.f32 %v1381, %v1700
        %v1733 = vmul.f32 %v1383, %v1701
        %v1734 = vmul.f32 %v1385, %v1702
        %v1735 = vmul.f32 %v1387, %v1703
        %v1736 = vmul.f32 %v1389, %v1704
        %v1737 = vmul.f32 %v1391, %v1705
        %v1738 = vmul.f32 %v1393, %v1706
        %v1739 = vmul.f32 %v1395, %v1707
        %v1740 = vmul.f32 %v1397, %v1708
        %v1741 = vmul.f32 %v1399, %v1709
        %v1742 = vmul.f32 %v1401, %v1710
        %v1743 = vmul.f32 %v1403, %v1711
        %v1744 = vmul.f32 %v1405, %v1712
        %v1745 = vmul.f32 %v1407, %v1713
        %v1746 = vmul.f32 %v1409, %v1714
        %v1747 = vmul.f32 %v1411, %v1715
        %v1748 = vmul.f32 %v1413, %v1716
        %v1749 = vmul.f32 %v1415, %v1717
        %v1750 = vmul.f32 %v1417, %v1718
        %v1751 = vmul.f32 %v1419, %v1719
        %v1752 = vmul.f32 %v1421, %v1720
        %v1753 = vmul.f32 %v1423, %v1721
        %v1754 = vmul.f32 %v1425, %v1722
        %v1755 = vmul.f32 %v1427, %v1723
        %v1756 = vmul.f32 %v1429, %v1724
        %v1757 = vmul.f32 %v1431, %v1725
        %v1758 = vmul.f32 %v1433, %v1726
        %v1759 = vmul.f32 %v1435, %v1727
        %v1760 = vmul.f32 %v1437, %v1728
        %v1761 = vmul.f32 %v1439, %v1729
        %v1762 = vmul.f32 %v1441, %v1730
        %v1763 = vmul.f32 %v1443, %v1731
        %1764 = vadd.xlane.f32.xlu0 %v1637
        %v1765 = vpop.xlane.xlu0 %1764
        %1766 = vadd.xlane.f32.xlu0 %v1639
        %v1767 = vpop.xlane.xlu0 %1766
        %1768 = vadd.xlane.f32.xlu0 %v1641
        %v1769 = vpop.xlane.xlu0 %1768
        %1770 = vadd.xlane.f32.xlu0 %v1643
        %v1771 = vpop.xlane.xlu0 %1770
        %1772 = vadd.xlane.f32.xlu0 %v1645
        %v1773 = vpop.xlane.xlu0 %1772
        %1774 = vadd.xlane.f32.xlu0 %v1647
        %v1775 = vpop.xlane.xlu0 %1774
        %1776 = vadd.xlane.f32.xlu0 %v1649
        %v1777 = vpop.xlane.xlu0 %1776
        %1778 = vadd.xlane.f32.xlu0 %v1651
        %v1779 = vpop.xlane.xlu0 %1778
        %1780 = vadd.xlane.f32.xlu0 %v1653
        %v1781 = vpop.xlane.xlu0 %1780
        %1782 = vadd.xlane.f32.xlu0 %v1655
        %v1783 = vpop.xlane.xlu0 %1782
        %1784 = vadd.xlane.f32.xlu0 %v1657
        %v1785 = vpop.xlane.xlu0 %1784
        %1786 = vadd.xlane.f32.xlu0 %v1659
        %v1787 = vpop.xlane.xlu0 %1786
        %1788 = vadd.xlane.f32.xlu0 %v1661
        %v1789 = vpop.xlane.xlu0 %1788
        %1790 = vadd.xlane.f32.xlu0 %v1663
        %v1791 = vpop.xlane.xlu0 %1790
        %1792 = vadd.xlane.f32.xlu0 %v1665
        %v1793 = vpop.xlane.xlu0 %1792
        %1794 = vadd.xlane.f32.xlu0 %v1667
        %v1795 = vpop.xlane.xlu0 %1794
        %1796 = vadd.xlane.f32.xlu0 %v1669
        %v1797 = vpop.xlane.xlu0 %1796
        %1798 = vadd.xlane.f32.xlu0 %v1671
        %v1799 = vpop.xlane.xlu0 %1798
        %1800 = vadd.xlane.f32.xlu0 %v1673
        %v1801 = vpop.xlane.xlu0 %1800
        %1802 = vadd.xlane.f32.xlu0 %v1675
        %v1803 = vpop.xlane.xlu0 %1802
        %1804 = vadd.xlane.f32.xlu0 %v1677
        %v1805 = vpop.xlane.xlu0 %1804
        %1806 = vadd.xlane.f32.xlu0 %v1679
        %v1807 = vpop.xlane.xlu0 %1806
        %1808 = vadd.xlane.f32.xlu0 %v1681
        %v1809 = vpop.xlane.xlu0 %1808
        %1810 = vadd.xlane.f32.xlu0 %v1683
        %v1811 = vpop.xlane.xlu0 %1810
        %1812 = vadd.xlane.f32.xlu0 %v1685
        %v1813 = vpop.xlane.xlu0 %1812
        %1814 = vadd.xlane.f32.xlu0 %v1687
        %v1815 = vpop.xlane.xlu0 %1814
        %1816 = vadd.xlane.f32.xlu0 %v1689
        %v1817 = vpop.xlane.xlu0 %1816
        %1818 = vadd.xlane.f32.xlu0 %v1691
        %v1819 = vpop.xlane.xlu0 %1818
        %1820 = vadd.xlane.f32.xlu0 %v1693
        %v1821 = vpop.xlane.xlu0 %1820
        %1822 = vadd.xlane.f32.xlu0 %v1695
        %v1823 = vpop.xlane.xlu0 %1822
        %1824 = vadd.xlane.f32.xlu0 %v1697
        %v1825 = vpop.xlane.xlu0 %1824
        %1826 = vadd.xlane.f32.xlu0 %v1699
        %v1827 = vpop.xlane.xlu0 %1826
        %v1828 = vadd.f32 %v1732, %v1765
        %v1829 = vadd.f32 %v1733, %v1767
        %v1830 = vadd.f32 %v1734, %v1769
        %v1831 = vadd.f32 %v1735, %v1771
        %v1832 = vadd.f32 %v1736, %v1773
        %v1833 = vadd.f32 %v1737, %v1775
        %v1834 = vadd.f32 %v1738, %v1777
        %v1835 = vadd.f32 %v1739, %v1779
        %v1836 = vadd.f32 %v1740, %v1781
        %v1837 = vadd.f32 %v1741, %v1783
        %v1838 = vadd.f32 %v1742, %v1785
        %v1839 = vadd.f32 %v1743, %v1787
        %v1840 = vadd.f32 %v1744, %v1789
        %v1841 = vadd.f32 %v1745, %v1791
        %v1842 = vadd.f32 %v1746, %v1793
        %v1843 = vadd.f32 %v1747, %v1795
        %v1844 = vadd.f32 %v1748, %v1797
        %v1845 = vadd.f32 %v1749, %v1799
        %v1846 = vadd.f32 %v1750, %v1801
        %v1847 = vadd.f32 %v1751, %v1803
        %v1848 = vadd.f32 %v1752, %v1805
        %v1849 = vadd.f32 %v1753, %v1807
        %v1850 = vadd.f32 %v1754, %v1809
        %v1851 = vadd.f32 %v1755, %v1811
        %v1852 = vadd.f32 %v1756, %v1813
        %v1853 = vadd.f32 %v1757, %v1815
        %v1854 = vadd.f32 %v1758, %v1817
        %v1855 = vadd.f32 %v1759, %v1819
        %v1856 = vadd.f32 %v1760, %v1821
        %v1857 = vadd.f32 %v1761, %v1823
        %v1858 = vadd.f32 %v1762, %v1825
        %v1859 = vadd.f32 %v1763, %v1827
        %vm1860 = vcmask 7168
        %1861 = vst.msk [vmem:[#allocation4] sm:$0xff] %vm1860, %v1828
        %1862 = vst.msk [vmem:[#allocation4 + $0x8] sm:$0xff] %vm1860, %v1829
        %1863 = vst.msk [vmem:[#allocation4 + $0x10] sm:$0xff] %vm1860, %v1830
        %1864 = vst.msk [vmem:[#allocation4 + $0x18] sm:$0xff] %vm1860, %v1831
        %1865 = vst.msk [vmem:[#allocation4 + $0x20] sm:$0xff] %vm1860, %v1832
        %1866 = vst.msk [vmem:[#allocation4 + $0x28] sm:$0xff] %vm1860, %v1833
        %1867 = vst.msk [vmem:[#allocation4 + $0x30] sm:$0xff] %vm1860, %v1834
        %1868 = vst.msk [vmem:[#allocation4 + $0x38] sm:$0xff] %vm1860, %v1835
        %1869 = vst.msk [vmem:[#allocation4 + $0x40] sm:$0xff] %vm1860, %v1836
        %1870 = vst.msk [vmem:[#allocation4 + $0x48] sm:$0xff] %vm1860, %v1837
        %1871 = vst.msk [vmem:[#allocation4 + $0x50] sm:$0xff] %vm1860, %v1838
        %1872 = vst.msk [vmem:[#allocation4 + $0x58] sm:$0xff] %vm1860, %v1839
        %1873 = vst.msk [vmem:[#allocation4 + $0x60] sm:$0xff] %vm1860, %v1840
        %1874 = vst.msk [vmem:[#allocation4 + $0x68] sm:$0xff] %vm1860, %v1841
        %1875 = vst.msk [vmem:[#allocation4 + $0x70] sm:$0xff] %vm1860, %v1842
        %1876 = vst.msk [vmem:[#allocation4 + $0x78] sm:$0xff] %vm1860, %v1843
        %1877 = vst.msk [vmem:[#allocation4 + $0x80] sm:$0xff] %vm1860, %v1844
        %1878 = vst.msk [vmem:[#allocation4 + $0x88] sm:$0xff] %vm1860, %v1845
        %1879 = vst.msk [vmem:[#allocation4 + $0x90] sm:$0xff] %vm1860, %v1846
        %1880 = vst.msk [vmem:[#allocation4 + $0x98] sm:$0xff] %vm1860, %v1847
        %1881 = vst.msk [vmem:[#allocation4 + $0xa0] sm:$0xff] %vm1860, %v1848
        %1882 = vst.msk [vmem:[#allocation4 + $0xa8] sm:$0xff] %vm1860, %v1849
        %1883 = vst.msk [vmem:[#allocation4 + $0xb0] sm:$0xff] %vm1860, %v1850
        %1884 = vst.msk [vmem:[#allocation4 + $0xb8] sm:$0xff] %vm1860, %v1851
        %1885 = vst.msk [vmem:[#allocation4 + $0xc0] sm:$0xff] %vm1860, %v1852
        %1886 = vst.msk [vmem:[#allocation4 + $0xc8] sm:$0xff] %vm1860, %v1853
        %1887 = vst.msk [vmem:[#allocation4 + $0xd0] sm:$0xff] %vm1860, %v1854
        %1888 = vst.msk [vmem:[#allocation4 + $0xd8] sm:$0xff] %vm1860, %v1855
        %1889 = vst.msk [vmem:[#allocation4 + $0xe0] sm:$0xff] %vm1860, %v1856
        %1890 = vst.msk [vmem:[#allocation4 + $0xe8] sm:$0xff] %vm1860, %v1857
        %1891 = vst.msk [vmem:[#allocation4 + $0xf0] sm:$0xff] %vm1860, %v1858
        %1892 = vst.msk [vmem:[#allocation4 + $0xf8] sm:$0xff] %vm1860, %v1859
        %v1893 = vld [vmem:[#allocation5] sm:$0xff]
        %v1894 = vld [vmem:[#allocation5 + $0x8] sm:$0xff]
        %v1895 = vld [vmem:[#allocation5 + $0x10] sm:$0xff]
        %v1896 = vld [vmem:[#allocation5 + $0x18] sm:$0xff]
        %v1897 = vld [vmem:[#allocation5 + $0x20] sm:$0xff]
        %v1898 = vld [vmem:[#allocation5 + $0x28] sm:$0xff]
        %v1899 = vld [vmem:[#allocation5 + $0x30] sm:$0xff]
        %v1900 = vld [vmem:[#allocation5 + $0x38] sm:$0xff]
        %v1901 = vld [vmem:[#allocation5 + $0x40] sm:$0xff]
        %v1902 = vld [vmem:[#allocation5 + $0x48] sm:$0xff]
        %v1903 = vld [vmem:[#allocation5 + $0x50] sm:$0xff]
        %v1904 = vld [vmem:[#allocation5 + $0x58] sm:$0xff]
        %v1905 = vld [vmem:[#allocation5 + $0x60] sm:$0xff]
        %v1906 = vld [vmem:[#allocation5 + $0x68] sm:$0xff]
        %v1907 = vld [vmem:[#allocation5 + $0x70] sm:$0xff]
        %v1908 = vld [vmem:[#allocation5 + $0x78] sm:$0xff]
        %v1909 = vld [vmem:[#allocation5 + $0x80] sm:$0xff]
        %v1910 = vld [vmem:[#allocation5 + $0x88] sm:$0xff]
        %v1911 = vld [vmem:[#allocation5 + $0x90] sm:$0xff]
        %v1912 = vld [vmem:[#allocation5 + $0x98] sm:$0xff]
        %v1913 = vld [vmem:[#allocation5 + $0xa0] sm:$0xff]
        %v1914 = vld [vmem:[#allocation5 + $0xa8] sm:$0xff]
        %v1915 = vld [vmem:[#allocation5 + $0xb0] sm:$0xff]
        %v1916 = vld [vmem:[#allocation5 + $0xb8] sm:$0xff]
        %v1917 = vld [vmem:[#allocation5 + $0xc0] sm:$0xff]
        %v1918 = vld [vmem:[#allocation5 + $0xc8] sm:$0xff]
        %v1919 = vld [vmem:[#allocation5 + $0xd0] sm:$0xff]
        %v1920 = vld [vmem:[#allocation5 + $0xd8] sm:$0xff]
        %v1921 = vld [vmem:[#allocation5 + $0xe0] sm:$0xff]
        %v1922 = vld [vmem:[#allocation5 + $0xe8] sm:$0xff]
        %v1923 = vld [vmem:[#allocation5 + $0xf0] sm:$0xff]
        %v1924 = vld [vmem:[#allocation5 + $0xf8] sm:$0xff]
        %1926 = vset.pattern.permute.xlu0 0
        %1927 = vperm.xlu0 %1926, %v1381
        %v1928 = vpop.permute.xlu0 %1927
        %1931 = vset.pattern.permute.xlu0 0
        %1932 = vperm.xlu0 %1931, %v1383
        %v1933 = vpop.permute.xlu0 %1932
        %1936 = vset.pattern.permute.xlu0 0
        %1937 = vperm.xlu0 %1936, %v1385
        %v1938 = vpop.permute.xlu0 %1937
        %1941 = vset.pattern.permute.xlu0 0
        %1942 = vperm.xlu0 %1941, %v1387
        %v1943 = vpop.permute.xlu0 %1942
        %1946 = vset.pattern.permute.xlu0 0
        %1947 = vperm.xlu0 %1946, %v1389
        %v1948 = vpop.permute.xlu0 %1947
        %1951 = vset.pattern.permute.xlu0 0
        %1952 = vperm.xlu0 %1951, %v1391
        %v1953 = vpop.permute.xlu0 %1952
        %1956 = vset.pattern.permute.xlu0 0
        %1957 = vperm.xlu0 %1956, %v1393
        %v1958 = vpop.permute.xlu0 %1957
        %1961 = vset.pattern.permute.xlu0 0
        %1962 = vperm.xlu0 %1961, %v1395
        %v1963 = vpop.permute.xlu0 %1962
        %1966 = vset.pattern.permute.xlu0 0
        %1967 = vperm.xlu0 %1966, %v1397
        %v1968 = vpop.permute.xlu0 %1967
        %1971 = vset.pattern.permute.xlu0 0
        %1972 = vperm.xlu0 %1971, %v1399
        %v1973 = vpop.permute.xlu0 %1972
        %1976 = vset.pattern.permute.xlu0 0
        %1977 = vperm.xlu0 %1976, %v1401
        %v1978 = vpop.permute.xlu0 %1977
        %1981 = vset.pattern.permute.xlu0 0
        %1982 = vperm.xlu0 %1981, %v1403
        %v1983 = vpop.permute.xlu0 %1982
        %1986 = vset.pattern.permute.xlu0 0
        %1987 = vperm.xlu0 %1986, %v1405
        %v1988 = vpop.permute.xlu0 %1987
        %1991 = vset.pattern.permute.xlu0 0
        %1992 = vperm.xlu0 %1991, %v1407
        %v1993 = vpop.permute.xlu0 %1992
        %1996 = vset.pattern.permute.xlu0 0
        %1997 = vperm.xlu0 %1996, %v1409
        %v1998 = vpop.permute.xlu0 %1997
        %2001 = vset.pattern.permute.xlu0 0
        %2002 = vperm.xlu0 %2001, %v1411
        %v2003 = vpop.permute.xlu0 %2002
        %2006 = vset.pattern.permute.xlu0 0
        %2007 = vperm.xlu0 %2006, %v1413
        %v2008 = vpop.permute.xlu0 %2007
        %2011 = vset.pattern.permute.xlu0 0
        %2012 = vperm.xlu0 %2011, %v1415
        %v2013 = vpop.permute.xlu0 %2012
        %2016 = vset.pattern.permute.xlu0 0
        %2017 = vperm.xlu0 %2016, %v1417
        %v2018 = vpop.permute.xlu0 %2017
        %2021 = vset.pattern.permute.xlu0 0
        %2022 = vperm.xlu0 %2021, %v1419
        %v2023 = vpop.permute.xlu0 %2022
        %2026 = vset.pattern.permute.xlu0 0
        %2027 = vperm.xlu0 %2026, %v1421
        %v2028 = vpop.permute.xlu0 %2027
        %2031 = vset.pattern.permute.xlu0 0
        %2032 = vperm.xlu0 %2031, %v1423
        %v2033 = vpop.permute.xlu0 %2032
        %2036 = vset.pattern.permute.xlu0 0
        %2037 = vperm.xlu0 %2036, %v1425
        %v2038 = vpop.permute.xlu0 %2037
        %2041 = vset.pattern.permute.xlu0 0
        %2042 = vperm.xlu0 %2041, %v1427
        %v2043 = vpop.permute.xlu0 %2042
        %2046 = vset.pattern.permute.xlu0 0
        %2047 = vperm.xlu0 %2046, %v1429
        %v2048 = vpop.permute.xlu0 %2047
        %2051 = vset.pattern.permute.xlu0 0
        %2052 = vperm.xlu0 %2051, %v1431
        %v2053 = vpop.permute.xlu0 %2052
        %2056 = vset.pattern.permute.xlu0 0
        %2057 = vperm.xlu0 %2056, %v1433
        %v2058 = vpop.permute.xlu0 %2057
        %2061 = vset.pattern.permute.xlu0 0
        %2062 = vperm.xlu0 %2061, %v1435
        %v2063 = vpop.permute.xlu0 %2062
        %2066 = vset.pattern.permute.xlu0 0
        %2067 = vperm.xlu0 %2066, %v1437
        %v2068 = vpop.permute.xlu0 %2067
        %2071 = vset.pattern.permute.xlu0 0
        %2072 = vperm.xlu0 %2071, %v1439
        %v2073 = vpop.permute.xlu0 %2072
        %2076 = vset.pattern.permute.xlu0 0
        %2077 = vperm.xlu0 %2076, %v1441
        %v2078 = vpop.permute.xlu0 %2077
        %2081 = vset.pattern.permute.xlu0 0
        %2082 = vperm.xlu0 %2081, %v1443
        %v2083 = vpop.permute.xlu0 %2082
        %v2085 = vmul.f32 %v1928, %v1893
        %v2086 = vmul.f32 %v1933, %v1894
        %v2087 = vmul.f32 %v1938, %v1895
        %v2088 = vmul.f32 %v1943, %v1896
        %v2089 = vmul.f32 %v1948, %v1897
        %v2090 = vmul.f32 %v1953, %v1898
        %v2091 = vmul.f32 %v1958, %v1899
        %v2092 = vmul.f32 %v1963, %v1900
        %v2093 = vmul.f32 %v1968, %v1901
        %v2094 = vmul.f32 %v1973, %v1902
        %v2095 = vmul.f32 %v1978, %v1903
        %v2096 = vmul.f32 %v1983, %v1904
        %v2097 = vmul.f32 %v1988, %v1905
        %v2098 = vmul.f32 %v1993, %v1906
        %v2099 = vmul.f32 %v1998, %v1907
        %v2100 = vmul.f32 %v2003, %v1908
        %v2101 = vmul.f32 %v2008, %v1909
        %v2102 = vmul.f32 %v2013, %v1910
        %v2103 = vmul.f32 %v2018, %v1911
        %v2104 = vmul.f32 %v2023, %v1912
        %v2105 = vmul.f32 %v2028, %v1913
        %v2106 = vmul.f32 %v2033, %v1914
        %v2107 = vmul.f32 %v2038, %v1915
        %v2108 = vmul.f32 %v2043, %v1916
        %v2109 = vmul.f32 %v2048, %v1917
        %v2110 = vmul.f32 %v2053, %v1918
        %v2111 = vmul.f32 %v2058, %v1919
        %v2112 = vmul.f32 %v2063, %v1920
        %v2113 = vmul.f32 %v2068, %v1921
        %v2114 = vmul.f32 %v2073, %v1922
        %v2115 = vmul.f32 %v2078, %v1923
        %v2116 = vmul.f32 %v2083, %v1924
        %v2117 = vpack.c.bf16 %v1639, %v1637
        %v2118 = vpack.c.bf16 %v1643, %v1641
        %v2119 = vpack.c.bf16 %v1647, %v1645
        %v2120 = vpack.c.bf16 %v1651, %v1649
        %v2121 = vpack.c.bf16 %v1655, %v1653
        %v2122 = vpack.c.bf16 %v1659, %v1657
        %v2123 = vpack.c.bf16 %v1663, %v1661
        %v2124 = vpack.c.bf16 %v1667, %v1665
        %v2125 = vpack.c.bf16 %v1671, %v1669
        %v2126 = vpack.c.bf16 %v1675, %v1673
        %v2127 = vpack.c.bf16 %v1679, %v1677
        %v2128 = vpack.c.bf16 %v1683, %v1681
        %v2129 = vpack.c.bf16 %v1687, %v1685
        %v2130 = vpack.c.bf16 %v1691, %v1689
        %v2131 = vpack.c.bf16 %v1695, %v1693
        %v2132 = vpack.c.bf16 %v1699, %v1697
        %2133 = vmatprep.subr.bf16.mxu0 0
        %2134 = vmatpush1.bf16.msra.mxu0 %v1022
        %2135 = vmatprep.subr.bf16.mxu0 0
        %2136 = vmatpush1.bf16.msra.mxu0 %v1023
        %2137 = vmatprep.subr.bf16.mxu0 0
        %2138 = vmatpush1.bf16.msra.mxu0 %v1024
        %2139 = vmatprep.subr.bf16.mxu0 0
        %2140 = vmatpush1.bf16.msra.mxu0 %v1025
        %2141 = vmatprep.subr.bf16.mxu0 0
        %2142 = vmatpush1.bf16.msra.mxu0 %v1026
        %2143 = vmatprep.subr.bf16.mxu0 0
        %2144 = vmatpush1.bf16.msra.mxu0 %v1027
        %2145 = vmatprep.subr.bf16.mxu0 0
        %2146 = vmatpush1.bf16.msra.mxu0 %v1028
        %2147 = vmatprep.subr.bf16.mxu0 0
        %2148 = vmatpush1.bf16.msra.mxu0 %v1029
        %2149 = vmatprep.subr.bf16.mxu0 0
        %2150 = vmatpush1.bf16.msra.mxu0 0
        %2151 = vmatprep.subr.bf16.mxu0 0
        %2152 = vmatpush1.bf16.msra.mxu0 0
        %2153 = vmatprep.subr.bf16.mxu0 0
        %2154 = vmatpush1.bf16.msra.mxu0 0
        %2155 = vmatprep.subr.bf16.mxu0 0
        %2156 = vmatpush1.bf16.msra.mxu0 0
        %2157 = vmatprep.subr.bf16.mxu0 0
        %2158 = vmatpush1.bf16.msra.mxu0 0
        %2159 = vmatprep.subr.bf16.mxu0 0
        %2160 = vmatpush1.bf16.msra.mxu0 0
        %2161 = vmatprep.subr.bf16.mxu0 0
        %2162 = vmatpush1.bf16.msra.mxu0 0
        %2163 = vmatprep.subr.bf16.mxu0 0
        %2164 = vmatpush1.bf16.msra.mxu0 0
        %2165 = vmatprep.mubr.bf16.mxu0 0
        %2166 = vmatmul.mubr.bf16.gmra.mrb[0].mxu0 %v2117
        %v2167 = vpop.f32.mrb[0].mxu0
        %v2168 = vadd.f32 0.0, %v2167
        %v2169 = vpop.f32.mrb[0].mxu0
        %v2170 = vpop.f32.mrb[0].mxu0
        %v2171 = vadd.f32 0.0, %v2170
        %v2172 = vpop.f32.mrb[0].mxu0
        %2173 = vmatprep.mubr.bf16.mxu0 0
        %2174 = vmatmul.mubr.bf16.gmra.mrb[0].mxu0 %v2118
        %v2175 = vpop.f32.mrb[0].mxu0
        %v2176 = vadd.f32 0.0, %v2175
        %v2177 = vpop.f32.mrb[0].mxu0
        %v2178 = vpop.f32.mrb[0].mxu0
        %v2179 = vadd.f32 0.0, %v2178
        %v2180 = vpop.f32.mrb[0].mxu0
        %2181 = vmatprep.mubr.bf16.mxu0 0
        %2182 = vmatmul.mubr.bf16.gmra.mrb[0].mxu0 %v2119
        %v2183 = vpop.f32.mrb[0].mxu0
        %v2184 = vadd.f32 0.0, %v2183
        %v2185 = vpop.f32.mrb[0].mxu0
        %v2186 = vpop.f32.mrb[0].mxu0
        %v2187 = vadd.f32 0.0, %v2186
        %v2188 = vpop.f32.mrb[0].mxu0
        %2189 = vmatprep.mubr.bf16.mxu0 0
        %2190 = vmatmul.mubr.bf16.gmra.mrb[0].mxu0 %v2120
        %v2191 = vpop.f32.mrb[0].mxu0
        %v2192 = vadd.f32 0.0, %v2191
        %v2193 = vpop.f32.mrb[0].mxu0
        %v2194 = vpop.f32.mrb[0].mxu0
        %v2195 = vadd.f32 0.0, %v2194
        %v2196 = vpop.f32.mrb[0].mxu0
        %2197 = vmatprep.mubr.bf16.mxu0 0
        %2198 = vmatmul.mubr.bf16.gmra.mrb[0].mxu0 %v2121
        %v2199 = vpop.f32.mrb[0].mxu0
        %v2200 = vadd.f32 0.0, %v2199
        %v2201 = vpop.f32.mrb[0].mxu0
        %v2202 = vpop.f32.mrb[0].mxu0
        %v2203 = vadd.f32 0.0, %v2202
        %v2204 = vpop.f32.mrb[0].mxu0
        %2205 = vmatprep.mubr.bf16.mxu0 0
        %2206 = vmatmul.mubr.bf16.gmra.mrb[0].mxu0 %v2122
        %v2207 = vpop.f32.mrb[0].mxu0
        %v2208 = vadd.f32 0.0, %v2207
        %v2209 = vpop.f32.mrb[0].mxu0
        %v2210 = vpop.f32.mrb[0].mxu0
        %v2211 = vadd.f32 0.0, %v2210
        %v2212 = vpop.f32.mrb[0].mxu0
        %2213 = vmatprep.mubr.bf16.mxu0 0
        %2214 = vmatmul.mubr.bf16.gmra.mrb[0].mxu0 %v2123
        %v2215 = vpop.f32.mrb[0].mxu0
        %v2216 = vadd.f32 0.0, %v2215
        %v2217 = vpop.f32.mrb[0].mxu0
        %v2218 = vpop.f32.mrb[0].mxu0
        %v2219 = vadd.f32 0.0, %v2218
        %v2220 = vpop.f32.mrb[0].mxu0
        %2221 = vmatprep.mubr.bf16.mxu0 0
        %2222 = vmatmul.mubr.bf16.gmra.mrb[0].mxu0 %v2124
        %v2223 = vpop.f32.mrb[0].mxu0
        %v2224 = vadd.f32 0.0, %v2223
        %v2225 = vpop.f32.mrb[0].mxu0
        %v2226 = vpop.f32.mrb[0].mxu0
        %v2227 = vadd.f32 0.0, %v2226
        %v2228 = vpop.f32.mrb[0].mxu0
        %2229 = vmatprep.mubr.bf16.mxu0 0
        %2230 = vmatmul.mubr.bf16.gmra.mrb[0].mxu0 %v2125
        %v2231 = vpop.f32.mrb[0].mxu0
        %v2232 = vadd.f32 0.0, %v2231
        %v2233 = vpop.f32.mrb[0].mxu0
        %v2234 = vpop.f32.mrb[0].mxu0
        %v2235 = vadd.f32 0.0, %v2234
        %v2236 = vpop.f32.mrb[0].mxu0
        %2237 = vmatprep.mubr.bf16.mxu0 0
        %2238 = vmatmul.mubr.bf16.gmra.mrb[0].mxu0 %v2126
        %v2239 = vpop.f32.mrb[0].mxu0
        %v2240 = vadd.f32 0.0, %v2239
        %v2241 = vpop.f32.mrb[0].mxu0
        %v2242 = vpop.f32.mrb[0].mxu0
        %v2243 = vadd.f32 0.0, %v2242
        %v2244 = vpop.f32.mrb[0].mxu0
        %2245 = vmatprep.mubr.bf16.mxu0 0
        %2246 = vmatmul.mubr.bf16.gmra.mrb[0].mxu0 %v2127
        %v2247 = vpop.f32.mrb[0].mxu0
        %v2248 = vadd.f32 0.0, %v2247
        %v2249 = vpop.f32.mrb[0].mxu0
        %v2250 = vpop.f32.mrb[0].mxu0
        %v2251 = vadd.f32 0.0, %v2250
        %v2252 = vpop.f32.mrb[0].mxu0
        %2253 = vmatprep.mubr.bf16.mxu0 0
        %2254 = vmatmul.mubr.bf16.gmra.mrb[0].mxu0 %v2128
        %v2255 = vpop.f32.mrb[0].mxu0
        %v2256 = vadd.f32 0.0, %v2255
        %v2257 = vpop.f32.mrb[0].mxu0
        %v2258 = vpop.f32.mrb[0].mxu0
        %v2259 = vadd.f32 0.0, %v2258
        %v2260 = vpop.f32.mrb[0].mxu0
        %2261 = vmatprep.mubr.bf16.mxu0 0
        %2262 = vmatmul.mubr.bf16.gmra.mrb[0].mxu0 %v2129
        %v2263 = vpop.f32.mrb[0].mxu0
        %v2264 = vadd.f32 0.0, %v2263
        %v2265 = vpop.f32.mrb[0].mxu0
        %v2266 = vpop.f32.mrb[0].mxu0
        %v2267 = vadd.f32 0.0, %v2266
        %v2268 = vpop.f32.mrb[0].mxu0
        %2269 = vmatprep.mubr.bf16.mxu0 0
        %2270 = vmatmul.mubr.bf16.gmra.mrb[0].mxu0 %v2130
        %v2271 = vpop.f32.mrb[0].mxu0
        %v2272 = vadd.f32 0.0, %v2271
        %v2273 = vpop.f32.mrb[0].mxu0
        %v2274 = vpop.f32.mrb[0].mxu0
        %v2275 = vadd.f32 0.0, %v2274
        %v2276 = vpop.f32.mrb[0].mxu0
        %2277 = vmatprep.mubr.bf16.mxu0 0
        %2278 = vmatmul.mubr.bf16.gmra.mrb[0].mxu0 %v2131
        %v2279 = vpop.f32.mrb[0].mxu0
        %v2280 = vadd.f32 0.0, %v2279
        %v2281 = vpop.f32.mrb[0].mxu0
        %v2282 = vpop.f32.mrb[0].mxu0
        %v2283 = vadd.f32 0.0, %v2282
        %v2284 = vpop.f32.mrb[0].mxu0
        %2285 = vmatprep.mubr.bf16.mxu0 0
        %2286 = vmatmul.mubr.bf16.gmra.mrb[0].mxu0 %v2132
        %v2287 = vpop.f32.mrb[0].mxu0
        %v2288 = vadd.f32 0.0, %v2287
        %v2289 = vpop.f32.mrb[0].mxu0
        %v2290 = vpop.f32.mrb[0].mxu0
        %v2291 = vadd.f32 0.0, %v2290
        %v2292 = vpop.f32.mrb[0].mxu0
        %2293 = vdwg.mxu0
        %v2294 = vadd.f32 %v2085, %v2168
        %v2295 = vadd.f32 %v2086, %v2171
        %v2296 = vadd.f32 %v2087, %v2176
        %v2297 = vadd.f32 %v2088, %v2179
        %v2298 = vadd.f32 %v2089, %v2184
        %v2299 = vadd.f32 %v2090, %v2187
        %v2300 = vadd.f32 %v2091, %v2192
        %v2301 = vadd.f32 %v2092, %v2195
        %v2302 = vadd.f32 %v2093, %v2200
        %v2303 = vadd.f32 %v2094, %v2203
        %v2304 = vadd.f32 %v2095, %v2208
        %v2305 = vadd.f32 %v2096, %v2211
        %v2306 = vadd.f32 %v2097, %v2216
        %v2307 = vadd.f32 %v2098, %v2219
        %v2308 = vadd.f32 %v2099, %v2224
        %v2309 = vadd.f32 %v2100, %v2227
        %v2310 = vadd.f32 %v2101, %v2232
        %v2311 = vadd.f32 %v2102, %v2235
        %v2312 = vadd.f32 %v2103, %v2240
        %v2313 = vadd.f32 %v2104, %v2243
        %v2314 = vadd.f32 %v2105, %v2248
        %v2315 = vadd.f32 %v2106, %v2251
        %v2316 = vadd.f32 %v2107, %v2256
        %v2317 = vadd.f32 %v2108, %v2259
        %v2318 = vadd.f32 %v2109, %v2264
        %v2319 = vadd.f32 %v2110, %v2267
        %v2320 = vadd.f32 %v2111, %v2272
        %v2321 = vadd.f32 %v2112, %v2275
        %v2322 = vadd.f32 %v2113, %v2280
        %v2323 = vadd.f32 %v2114, %v2283
        %v2324 = vadd.f32 %v2115, %v2288
        %v2325 = vadd.f32 %v2116, %v2291
        %2326 = vst [vmem:[#allocation5] sm:$0xff] %v2294
        %2327 = vst [vmem:[#allocation5 + $0x8] sm:$0xff] %v2295
        %2328 = vst [vmem:[#allocation5 + $0x10] sm:$0xff] %v2296
        %2329 = vst [vmem:[#allocation5 + $0x18] sm:$0xff] %v2297
        %2330 = vst [vmem:[#allocation5 + $0x20] sm:$0xff] %v2298
        %2331 = vst [vmem:[#allocation5 + $0x28] sm:$0xff] %v2299
        %2332 = vst [vmem:[#allocation5 + $0x30] sm:$0xff] %v2300
        %2333 = vst [vmem:[#allocation5 + $0x38] sm:$0xff] %v2301
        %2334 = vst [vmem:[#allocation5 + $0x40] sm:$0xff] %v2302
        %2335 = vst [vmem:[#allocation5 + $0x48] sm:$0xff] %v2303
        %2336 = vst [vmem:[#allocation5 + $0x50] sm:$0xff] %v2304
        %2337 = vst [vmem:[#allocation5 + $0x58] sm:$0xff] %v2305
        %2338 = vst [vmem:[#allocation5 + $0x60] sm:$0xff] %v2306
        %2339 = vst [vmem:[#allocation5 + $0x68] sm:$0xff] %v2307
        %2340 = vst [vmem:[#allocation5 + $0x70] sm:$0xff] %v2308
        %2341 = vst [vmem:[#allocation5 + $0x78] sm:$0xff] %v2309
        %2342 = vst [vmem:[#allocation5 + $0x80] sm:$0xff] %v2310
        %2343 = vst [vmem:[#allocation5 + $0x88] sm:$0xff] %v2311
        %2344 = vst [vmem:[#allocation5 + $0x90] sm:$0xff] %v2312
        %2345 = vst [vmem:[#allocation5 + $0x98] sm:$0xff] %v2313
        %2346 = vst [vmem:[#allocation5 + $0xa0] sm:$0xff] %v2314
        %2347 = vst [vmem:[#allocation5 + $0xa8] sm:$0xff] %v2315
        %2348 = vst [vmem:[#allocation5 + $0xb0] sm:$0xff] %v2316
        %2349 = vst [vmem:[#allocation5 + $0xb8] sm:$0xff] %v2317
        %2350 = vst [vmem:[#allocation5 + $0xc0] sm:$0xff] %v2318
        %2351 = vst [vmem:[#allocation5 + $0xc8] sm:$0xff] %v2319
        %2352 = vst [vmem:[#allocation5 + $0xd0] sm:$0xff] %v2320
        %2353 = vst [vmem:[#allocation5 + $0xd8] sm:$0xff] %v2321
        %2354 = vst [vmem:[#allocation5 + $0xe0] sm:$0xff] %v2322
        %2355 = vst [vmem:[#allocation5 + $0xe8] sm:$0xff] %v2323
        %2356 = vst [vmem:[#allocation5 + $0xf0] sm:$0xff] %v2324
        %2357 = vst [vmem:[#allocation5 + $0xf8] sm:$0xff] %v2325
        %2358 = vst.msk [vmem:[#allocation3] sm:$0xff] %vm1860, %v1316
        %2359 = vst.msk [vmem:[#allocation3 + $0x8] sm:$0xff] %vm1860, %v1317
        %2360 = vst.msk [vmem:[#allocation3 + $0x10] sm:$0xff] %vm1860, %v1318
        %2361 = vst.msk [vmem:[#allocation3 + $0x18] sm:$0xff] %vm1860, %v1319
        %2362 = vst.msk [vmem:[#allocation3 + $0x20] sm:$0xff] %vm1860, %v1320
        %2363 = vst.msk [vmem:[#allocation3 + $0x28] sm:$0xff] %vm1860, %v1321
        %2364 = vst.msk [vmem:[#allocation3 + $0x30] sm:$0xff] %vm1860, %v1322
        %2365 = vst.msk [vmem:[#allocation3 + $0x38] sm:$0xff] %vm1860, %v1323
        %2366 = vst.msk [vmem:[#allocation3 + $0x40] sm:$0xff] %vm1860, %v1324
        %2367 = vst.msk [vmem:[#allocation3 + $0x48] sm:$0xff] %vm1860, %v1325
        %2368 = vst.msk [vmem:[#allocation3 + $0x50] sm:$0xff] %vm1860, %v1326
        %2369 = vst.msk [vmem:[#allocation3 + $0x58] sm:$0xff] %vm1860, %v1327
        %2370 = vst.msk [vmem:[#allocation3 + $0x60] sm:$0xff] %vm1860, %v1328
        %2371 = vst.msk [vmem:[#allocation3 + $0x68] sm:$0xff] %vm1860, %v1329
        %2372 = vst.msk [vmem:[#allocation3 + $0x70] sm:$0xff] %vm1860, %v1330
        %2373 = vst.msk [vmem:[#allocation3 + $0x78] sm:$0xff] %vm1860, %v1331
        %2374 = vst.msk [vmem:[#allocation3 + $0x80] sm:$0xff] %vm1860, %v1332
        %2375 = vst.msk [vmem:[#allocation3 + $0x88] sm:$0xff] %vm1860, %v1333
        %2376 = vst.msk [vmem:[#allocation3 + $0x90] sm:$0xff] %vm1860, %v1334
        %2377 = vst.msk [vmem:[#allocation3 + $0x98] sm:$0xff] %vm1860, %v1335
        %2378 = vst.msk [vmem:[#allocation3 + $0xa0] sm:$0xff] %vm1860, %v1336
        %2379 = vst.msk [vmem:[#allocation3 + $0xa8] sm:$0xff] %vm1860, %v1337
        %2380 = vst.msk [vmem:[#allocation3 + $0xb0] sm:$0xff] %vm1860, %v1338
        %2381 = vst.msk [vmem:[#allocation3 + $0xb8] sm:$0xff] %vm1860, %v1339
        %2382 = vst.msk [vmem:[#allocation3 + $0xc0] sm:$0xff] %vm1860, %v1340
        %2383 = vst.msk [vmem:[#allocation3 + $0xc8] sm:$0xff] %vm1860, %v1341
        %2384 = vst.msk [vmem:[#allocation3 + $0xd0] sm:$0xff] %vm1860, %v1342
        %2385 = vst.msk [vmem:[#allocation3 + $0xd8] sm:$0xff] %vm1860, %v1343
        %2386 = vst.msk [vmem:[#allocation3 + $0xe0] sm:$0xff] %vm1860, %v1344
        %2387 = vst.msk [vmem:[#allocation3 + $0xe8] sm:$0xff] %vm1860, %v1345
        %2388 = vst.msk [vmem:[#allocation3 + $0xf0] sm:$0xff] %vm1860, %v1346
        %2389 = vst.msk [vmem:[#allocation3 + $0xf8] sm:$0xff] %vm1860, %v1347
        %p2390 = scmp.eq.s32.totalorder %s24, 1
        // Predicated region
        $region45: #{sa_layer_forward.1} parent=39 // pred_check
          %p2391 = pneg %p2390
        $region46: #{sa_layer_forward.1} parent=39 // pred_check_branch
          %2393 = sbr.rel (%p2391) target = $region48
        $region47: #{sa_layer_forward.1} parent=39 // pred_region
          %v2394 = vld [vmem:[#allocation4] sm:$0xff]
          %v2395 = vld [vmem:[#allocation4 + $0x8] sm:$0xff]
          %v2396 = vld [vmem:[#allocation4 + $0x10] sm:$0xff]
          %v2397 = vld [vmem:[#allocation4 + $0x18] sm:$0xff]
          %v2398 = vld [vmem:[#allocation4 + $0x20] sm:$0xff]
          %v2399 = vld [vmem:[#allocation4 + $0x28] sm:$0xff]
          %v2400 = vld [vmem:[#allocation4 + $0x30] sm:$0xff]
          %v2401 = vld [vmem:[#allocation4 + $0x38] sm:$0xff]
          %v2402 = vld [vmem:[#allocation4 + $0x40] sm:$0xff]
          %v2403 = vld [vmem:[#allocation4 + $0x48] sm:$0xff]
          %v2404 = vld [vmem:[#allocation4 + $0x50] sm:$0xff]
          %v2405 = vld [vmem:[#allocation4 + $0x58] sm:$0xff]
          %v2406 = vld [vmem:[#allocation4 + $0x60] sm:$0xff]
          %v2407 = vld [vmem:[#allocation4 + $0x68] sm:$0xff]
          %v2408 = vld [vmem:[#allocation4 + $0x70] sm:$0xff]
          %v2409 = vld [vmem:[#allocation4 + $0x78] sm:$0xff]
          %v2410 = vld [vmem:[#allocation4 + $0x80] sm:$0xff]
          %v2411 = vld [vmem:[#allocation4 + $0x88] sm:$0xff]
          %v2412 = vld [vmem:[#allocation4 + $0x90] sm:$0xff]
          %v2413 = vld [vmem:[#allocation4 + $0x98] sm:$0xff]
          %v2414 = vld [vmem:[#allocation4 + $0xa0] sm:$0xff]
          %v2415 = vld [vmem:[#allocation4 + $0xa8] sm:$0xff]
          %v2416 = vld [vmem:[#allocation4 + $0xb0] sm:$0xff]
          %v2417 = vld [vmem:[#allocation4 + $0xb8] sm:$0xff]
          %v2418 = vld [vmem:[#allocation4 + $0xc0] sm:$0xff]
          %v2419 = vld [vmem:[#allocation4 + $0xc8] sm:$0xff]
          %v2420 = vld [vmem:[#allocation4 + $0xd0] sm:$0xff]
          %v2421 = vld [vmem:[#allocation4 + $0xd8] sm:$0xff]
          %v2422 = vld [vmem:[#allocation4 + $0xe0] sm:$0xff]
          %v2423 = vld [vmem:[#allocation4 + $0xe8] sm:$0xff]
          %v2424 = vld [vmem:[#allocation4 + $0xf0] sm:$0xff]
          %v2425 = vld [vmem:[#allocation4 + $0xf8] sm:$0xff]
          %v2426 = vrcp.pop %v2394
          %v2427 = vrcp.pop %v2395
          %v2428 = vrcp.pop %v2396
          %v2429 = vrcp.pop %v2397
          %v2430 = vrcp.pop %v2398
          %v2431 = vrcp.pop %v2399
          %v2432 = vrcp.pop %v2400
          %v2433 = vrcp.pop %v2401
          %v2434 = vrcp.pop %v2402
          %v2435 = vrcp.pop %v2403
          %v2436 = vrcp.pop %v2404
          %v2437 = vrcp.pop %v2405
          %v2438 = vrcp.pop %v2406
          %v2439 = vrcp.pop %v2407
          %v2440 = vrcp.pop %v2408
          %v2441 = vrcp.pop %v2409
          %v2442 = vrcp.pop %v2410
          %v2443 = vrcp.pop %v2411
          %v2444 = vrcp.pop %v2412
          %v2445 = vrcp.pop %v2413
          %v2446 = vrcp.pop %v2414
          %v2447 = vrcp.pop %v2415
          %v2448 = vrcp.pop %v2416
          %v2449 = vrcp.pop %v2417
          %v2450 = vrcp.pop %v2418
          %v2451 = vrcp.pop %v2419
          %v2452 = vrcp.pop %v2420
          %v2453 = vrcp.pop %v2421
          %v2454 = vrcp.pop %v2422
          %v2455 = vrcp.pop %v2423
          %v2456 = vrcp.pop %v2424
          %v2457 = vrcp.pop %v2425
          %v2458 = vld [vmem:[#allocation5] sm:$0xff]
          %v2459 = vld [vmem:[#allocation5 + $0x8] sm:$0xff]
          %v2460 = vld [vmem:[#allocation5 + $0x10] sm:$0xff]
          %v2461 = vld [vmem:[#allocation5 + $0x18] sm:$0xff]
          %v2462 = vld [vmem:[#allocation5 + $0x20] sm:$0xff]
          %v2463 = vld [vmem:[#allocation5 + $0x28] sm:$0xff]
          %v2464 = vld [vmem:[#allocation5 + $0x30] sm:$0xff]
          %v2465 = vld [vmem:[#allocation5 + $0x38] sm:$0xff]
          %v2466 = vld [vmem:[#allocation5 + $0x40] sm:$0xff]
          %v2467 = vld [vmem:[#allocation5 + $0x48] sm:$0xff]
          %v2468 = vld [vmem:[#allocation5 + $0x50] sm:$0xff]
          %v2469 = vld [vmem:[#allocation5 + $0x58] sm:$0xff]
          %v2470 = vld [vmem:[#allocation5 + $0x60] sm:$0xff]
          %v2471 = vld [vmem:[#allocation5 + $0x68] sm:$0xff]
          %v2472 = vld [vmem:[#allocation5 + $0x70] sm:$0xff]
          %v2473 = vld [vmem:[#allocation5 + $0x78] sm:$0xff]
          %v2474 = vld [vmem:[#allocation5 + $0x80] sm:$0xff]
          %v2475 = vld [vmem:[#allocation5 + $0x88] sm:$0xff]
          %v2476 = vld [vmem:[#allocation5 + $0x90] sm:$0xff]
          %v2477 = vld [vmem:[#allocation5 + $0x98] sm:$0xff]
          %v2478 = vld [vmem:[#allocation5 + $0xa0] sm:$0xff]
          %v2479 = vld [vmem:[#allocation5 + $0xa8] sm:$0xff]
          %v2480 = vld [vmem:[#allocation5 + $0xb0] sm:$0xff]
          %v2481 = vld [vmem:[#allocation5 + $0xb8] sm:$0xff]
          %v2482 = vld [vmem:[#allocation5 + $0xc0] sm:$0xff]
          %v2483 = vld [vmem:[#allocation5 + $0xc8] sm:$0xff]
          %v2484 = vld [vmem:[#allocation5 + $0xd0] sm:$0xff]
          %v2485 = vld [vmem:[#allocation5 + $0xd8] sm:$0xff]
          %v2486 = vld [vmem:[#allocation5 + $0xe0] sm:$0xff]
          %v2487 = vld [vmem:[#allocation5 + $0xe8] sm:$0xff]
          %v2488 = vld [vmem:[#allocation5 + $0xf0] sm:$0xff]
          %v2489 = vld [vmem:[#allocation5 + $0xf8] sm:$0xff]
          %2491 = vset.pattern.permute.xlu0 0
          %2492 = vperm.xlu0 %2491, %v2426
          %v2493 = vpop.permute.xlu0 %2492
          %2496 = vset.pattern.permute.xlu0 0
          %2497 = vperm.xlu0 %2496, %v2427
          %v2498 = vpop.permute.xlu0 %2497
          %2501 = vset.pattern.permute.xlu0 0
          %2502 = vperm.xlu0 %2501, %v2428
          %v2503 = vpop.permute.xlu0 %2502
          %2506 = vset.pattern.permute.xlu0 0
          %2507 = vperm.xlu0 %2506, %v2429
          %v2508 = vpop.permute.xlu0 %2507
          %2511 = vset.pattern.permute.xlu0 0
          %2512 = vperm.xlu0 %2511, %v2430
          %v2513 = vpop.permute.xlu0 %2512
          %2516 = vset.pattern.permute.xlu0 0
          %2517 = vperm.xlu0 %2516, %v2431
          %v2518 = vpop.permute.xlu0 %2517
          %2521 = vset.pattern.permute.xlu0 0
          %2522 = vperm.xlu0 %2521, %v2432
          %v2523 = vpop.permute.xlu0 %2522
          %2526 = vset.pattern.permute.xlu0 0
          %2527 = vperm.xlu0 %2526, %v2433
          %v2528 = vpop.permute.xlu0 %2527
          %2531 = vset.pattern.permute.xlu0 0
          %2532 = vperm.xlu0 %2531, %v2434
          %v2533 = vpop.permute.xlu0 %2532
          %2536 = vset.pattern.permute.xlu0 0
          %2537 = vperm.xlu0 %2536, %v2435
          %v2538 = vpop.permute.xlu0 %2537
          %2541 = vset.pattern.permute.xlu0 0
          %2542 = vperm.xlu0 %2541, %v2436
          %v2543 = vpop.permute.xlu0 %2542
          %2546 = vset.pattern.permute.xlu0 0
          %2547 = vperm.xlu0 %2546, %v2437
          %v2548 = vpop.permute.xlu0 %2547
          %2551 = vset.pattern.permute.xlu0 0
          %2552 = vperm.xlu0 %2551, %v2438
          %v2553 = vpop.permute.xlu0 %2552
          %2556 = vset.pattern.permute.xlu0 0
          %2557 = vperm.xlu0 %2556, %v2439
          %v2558 = vpop.permute.xlu0 %2557
          %2561 = vset.pattern.permute.xlu0 0
          %2562 = vperm.xlu0 %2561, %v2440
          %v2563 = vpop.permute.xlu0 %2562
          %2566 = vset.pattern.permute.xlu0 0
          %2567 = vperm.xlu0 %2566, %v2441
          %v2568 = vpop.permute.xlu0 %2567
          %2571 = vset.pattern.permute.xlu0 0
          %2572 = vperm.xlu0 %2571, %v2442
          %v2573 = vpop.permute.xlu0 %2572
          %2576 = vset.pattern.permute.xlu0 0
          %2577 = vperm.xlu0 %2576, %v2443
          %v2578 = vpop.permute.xlu0 %2577
          %2581 = vset.pattern.permute.xlu0 0
          %2582 = vperm.xlu0 %2581, %v2444
          %v2583 = vpop.permute.xlu0 %2582
          %2586 = vset.pattern.permute.xlu0 0
          %2587 = vperm.xlu0 %2586, %v2445
          %v2588 = vpop.permute.xlu0 %2587
          %2591 = vset.pattern.permute.xlu0 0
          %2592 = vperm.xlu0 %2591, %v2446
          %v2593 = vpop.permute.xlu0 %2592
          %2596 = vset.pattern.permute.xlu0 0
          %2597 = vperm.xlu0 %2596, %v2447
          %v2598 = vpop.permute.xlu0 %2597
          %2601 = vset.pattern.permute.xlu0 0
          %2602 = vperm.xlu0 %2601, %v2448
          %v2603 = vpop.permute.xlu0 %2602
          %2606 = vset.pattern.permute.xlu0 0
          %2607 = vperm.xlu0 %2606, %v2449
          %v2608 = vpop.permute.xlu0 %2607
          %2611 = vset.pattern.permute.xlu0 0
          %2612 = vperm.xlu0 %2611, %v2450
          %v2613 = vpop.permute.xlu0 %2612
          %2616 = vset.pattern.permute.xlu0 0
          %2617 = vperm.xlu0 %2616, %v2451
          %v2618 = vpop.permute.xlu0 %2617
          %2621 = vset.pattern.permute.xlu0 0
          %2622 = vperm.xlu0 %2621, %v2452
          %v2623 = vpop.permute.xlu0 %2622
          %2626 = vset.pattern.permute.xlu0 0
          %2627 = vperm.xlu0 %2626, %v2453
          %v2628 = vpop.permute.xlu0 %2627
          %2631 = vset.pattern.permute.xlu0 0
          %2632 = vperm.xlu0 %2631, %v2454
          %v2633 = vpop.permute.xlu0 %2632
          %2636 = vset.pattern.permute.xlu0 0
          %2637 = vperm.xlu0 %2636, %v2455
          %v2638 = vpop.permute.xlu0 %2637
          %2641 = vset.pattern.permute.xlu0 0
          %2642 = vperm.xlu0 %2641, %v2456
          %v2643 = vpop.permute.xlu0 %2642
          %2646 = vset.pattern.permute.xlu0 0
          %2647 = vperm.xlu0 %2646, %v2457
          %v2648 = vpop.permute.xlu0 %2647
          %v2650 = vmul.f32 %v2458, %v2493
          %v2651 = vmul.f32 %v2459, %v2498
          %v2652 = vmul.f32 %v2460, %v2503
          %v2653 = vmul.f32 %v2461, %v2508
          %v2654 = vmul.f32 %v2462, %v2513
          %v2655 = vmul.f32 %v2463, %v2518
          %v2656 = vmul.f32 %v2464, %v2523
          %v2657 = vmul.f32 %v2465, %v2528
          %v2658 = vmul.f32 %v2466, %v2533
          %v2659 = vmul.f32 %v2467, %v2538
          %v2660 = vmul.f32 %v2468, %v2543
          %v2661 = vmul.f32 %v2469, %v2548
          %v2662 = vmul.f32 %v2470, %v2553
          %v2663 = vmul.f32 %v2471, %v2558
          %v2664 = vmul.f32 %v2472, %v2563
          %v2665 = vmul.f32 %v2473, %v2568
          %v2666 = vmul.f32 %v2474, %v2573
          %v2667 = vmul.f32 %v2475, %v2578
          %v2668 = vmul.f32 %v2476, %v2583
          %v2669 = vmul.f32 %v2477, %v2588
          %v2670 = vmul.f32 %v2478, %v2593
          %v2671 = vmul.f32 %v2479, %v2598
          %v2672 = vmul.f32 %v2480, %v2603
          %v2673 = vmul.f32 %v2481, %v2608
          %v2674 = vmul.f32 %v2482, %v2613
          %v2675 = vmul.f32 %v2483, %v2618
          %v2676 = vmul.f32 %v2484, %v2623
          %v2677 = vmul.f32 %v2485, %v2628
          %v2678 = vmul.f32 %v2486, %v2633
          %v2679 = vmul.f32 %v2487, %v2638
          %v2680 = vmul.f32 %v2488, %v2643
          %v2681 = vmul.f32 %v2489, %v2648
          %2682 = vst [vmem:[%s255] sm:$0xff] %v2650
          %2683 = vst [vmem:[%s255 + $0x8] sm:$0xff] %v2651
          %2684 = vst [vmem:[%s255 + $0x10] sm:$0xff] %v2652
          %2685 = vst [vmem:[%s255 + $0x18] sm:$0xff] %v2653
          %2686 = vst [vmem:[%s255 + $0x20] sm:$0xff] %v2654
          %2687 = vst [vmem:[%s255 + $0x28] sm:$0xff] %v2655
          %2688 = vst [vmem:[%s255 + $0x30] sm:$0xff] %v2656
          %2689 = vst [vmem:[%s255 + $0x38] sm:$0xff] %v2657
          %2690 = vst [vmem:[%s255 + $0x40] sm:$0xff] %v2658
          %2691 = vst [vmem:[%s255 + $0x48] sm:$0xff] %v2659
          %2692 = vst [vmem:[%s255 + $0x50] sm:$0xff] %v2660
          %2693 = vst [vmem:[%s255 + $0x58] sm:$0xff] %v2661
          %2694 = vst [vmem:[%s255 + $0x60] sm:$0xff] %v2662
          %2695 = vst [vmem:[%s255 + $0x68] sm:$0xff] %v2663
          %2696 = vst [vmem:[%s255 + $0x70] sm:$0xff] %v2664
          %2697 = vst [vmem:[%s255 + $0x78] sm:$0xff] %v2665
          %2698 = vst [vmem:[%s255 + $0x80] sm:$0xff] %v2666
          %2699 = vst [vmem:[%s255 + $0x88] sm:$0xff] %v2667
          %2700 = vst [vmem:[%s255 + $0x90] sm:$0xff] %v2668
          %2701 = vst [vmem:[%s255 + $0x98] sm:$0xff] %v2669
          %2702 = vst [vmem:[%s255 + $0xa0] sm:$0xff] %v2670
          %2703 = vst [vmem:[%s255 + $0xa8] sm:$0xff] %v2671
          %2704 = vst [vmem:[%s255 + $0xb0] sm:$0xff] %v2672
          %2705 = vst [vmem:[%s255 + $0xb8] sm:$0xff] %v2673
          %2706 = vst [vmem:[%s255 + $0xc0] sm:$0xff] %v2674
          %2707 = vst [vmem:[%s255 + $0xc8] sm:$0xff] %v2675
          %2708 = vst [vmem:[%s255 + $0xd0] sm:$0xff] %v2676
          %2709 = vst [vmem:[%s255 + $0xd8] sm:$0xff] %v2677
          %2710 = vst [vmem:[%s255 + $0xe0] sm:$0xff] %v2678
          %2711 = vst [vmem:[%s255 + $0xe8] sm:$0xff] %v2679
          %2712 = vst [vmem:[%s255 + $0xf0] sm:$0xff] %v2680
          %2713 = vst [vmem:[%s255 + $0xf8] sm:$0xff] %v2681
        $region48: #{sa_layer_forward.1} parent=39 // pred_fallthru
          _
        %s2714 = sand.u32 %s156, 1
        %s2715 = scalar_lea.sflag [#allocation7], %s2714
        %s2716 = sand.u32 %s156, 1
        %s2717 = smul.addr %s2716, 256
        %s2718 = scalar_lea.vmem [#allocation6], %s2717
        // Predicated region
        $region49: #{sa_layer_forward.1} parent=39 // pred_check
          %p2719 = pneg %p166
        $region50: #{sa_layer_forward.1} parent=39 // pred_check_branch
          %2721 = sbr.rel (%p2719) target = $region52
        $region51: #{sa_layer_forward.1} parent=39 // pred_region
          %s2723 = ssub.s32 4096, 4096
          %2724 = vsyncadd %s2715, %s2723
          %s2725 = smul.addr %s23, 32
          %s2726 = smul.addr %s2725, 128
          %s2727 = scalar_lea.hbm %s5, %s2726
          %s2728 = sshll.u32 %s2718, 4
          %s2729 = int_to_ptr.vmem [resolvable:$true] %s2728
          %2734 = dma.vmem_to_hbm [thread:$0]  %s2729, 4096, %s2727, %s2715, 128, 128, 8
        $region52: #{sa_layer_forward.1} parent=39 // pred_fallthru
          _
      $region40: #{sa_layer_forward.1} parent=5 // pred_fallthru
        _
      %p2735 = scmp.le.s32.totalorder 2, %s14
      // Predicated region
      $region53: #{sa_layer_forward.1} parent=5 // pred_check
        %p2736 = pneg %p2735
      $region54: #{sa_layer_forward.1} parent=5 // pred_check_branch
        %2738 = sbr.rel (%p2736) target = $region56
      $region55: #{sa_layer_forward.1} parent=5 // pred_region
        %s2739 = ssub.s32 %s14, 2
        // Predicated region
        $region57: #{sa_layer_forward.1} parent=55 // pred_check
          %p2740 = pneg %p172
        $region58: #{sa_layer_forward.1} parent=55 // pred_check_branch
          %2742 = sbr.rel (%p2740) target = $region60
        $region59: #{sa_layer_forward.1} parent=55 // pred_region
          %s2743 = sand.u32 %s157, 1
          %s2744 = scalar_lea.sflag [#allocation7], %s2743
          %s2745 = sand.u32 %s157, 1
          %s2746 = smul.addr %s2745, 256
          %s2747 = scalar_lea.vmem [#allocation6], %s2746
          %2748 = dma.done %s2744, 4096
        $region60: #{sa_layer_forward.1} parent=55 // pred_fallthru
          _
      $region56: #{sa_layer_forward.1} parent=5 // pred_fallthru
        _
    $region6: #{sa_layer_forward.1} parent=1 // loop_footer
      %s18 = sadd.s32 1, %s14
    $region7: #{sa_layer_forward.1} parent=1 // loop_footer_branch
      %13 = sbr.rel target = $region3
    $region8: #{sa_layer_forward.1} parent=1 // loop_exit
      _
    %2749 = vsyncpa [#allocation7], 1
    %s2750 = scalar_lea.sflag [#allocation7], 1
    %2751 = vsyncpa %s2750, 1

</llo_original>
